<compile_context>
chip_gen: v5e
topology: v5e:2x2
jax: 0.10.0
libtpu: 0.0.40
codegen_flags: <defaults>
</compile_context>

<pallas_src>
import functools

import jax
import jax.numpy as jnp
from jax.experimental import pallas as pl
from jax.experimental.pallas import tpu as pltpu


# ----------------------------------------------------------------------------
# Fused kernel: 2-layer LSTM recurrence + Linear regression head
# ----------------------------------------------------------------------------
def _pred_lstm_kernel(x_ref, wx0_ref, wh0_ref, b0_ref, wxh1_ref, b1_ref,
                      wr_ref, br_ref, y_ref, hs_ref, *, seq_len, batch):
    """x_ref:   (S*B, I)   flattened time-major input
       wx0_ref: (I, 4H)    layer-0 input weights   (gate order [i|f|o|g])
       wh0_ref: (H, 4H)    layer-0 recurrent weights
       b0_ref:  (1, 4H)    layer-0 combined bias (b_ih + b_hh)
       wxh1_ref:(2H, 4H)   layer-1 stacked [Wx1; Wh1]
       b1_ref:  (1, 4H)    layer-1 combined bias
       wr_ref:  (H, O), br_ref: (1, O)   regression head
       y_ref:   (S*B, O)   output
       hs_ref:  (S*B, H)   VMEM scratch holding all layer-1 hidden states
    """
    H = wh0_ref.shape[0]

    # Hoisted layer-0 input projection, bias folded in: one big MXU call over
    # all timesteps (no serial dependence).
    xg = jnp.dot(x_ref[...], wx0_ref[...],
                 preferred_element_type=jnp.float32) + b0_ref[...]

    wh0 = wh0_ref[...]
    wxh1 = wxh1_ref[...]
    b1 = b1_ref[...]

    def gates_to_hc(gates, c_prev):
        # Gate layout is [i | f | o | g]: one sigmoid over 3H lanes, one tanh
        # over the last H lanes (2 transcendental pushes per cell, not 4).
        ifo = jax.nn.sigmoid(gates[:, :3 * H])
        g_g = jnp.tanh(gates[:, 3 * H:])
        i_g = ifo[:, :H]
        f_g = ifo[:, H:2 * H]
        o_g = ifo[:, 2 * H:3 * H]
        c_new = f_g * c_prev + i_g * g_g
        h_new = o_g * jnp.tanh(c_new)
        return h_new, c_new

    zeros = jnp.zeros((batch, H), jnp.float32)
    h1, c1, h2, c2 = zeros, zeros, zeros, zeros

    # Statically unrolled recurrence (seq_len is small and static).
    for t in range(seq_len):
        # Layer 0: only the recurrent matmul is on the serial path.
        g0 = xg[t * batch:(t + 1) * batch, :] + jnp.dot(
            h1, wh0, preferred_element_type=jnp.float32)
        h1, c1 = gates_to_hc(g0, c1)

        # Layer 1: single merged matmul over the concatenated [h1 | h2_prev].
        g1 = jnp.dot(jnp.concatenate([h1, h2], axis=1), wxh1,
                     preferred_element_type=jnp.float32) + b1
        h2, c2 = gates_to_hc(g1, c2)

        hs_ref[t * batch:(t + 1) * batch, :] = h2

    # Fused linear head over the whole (S*B, H) slab: x.view(s*b,h) @ W + b.
    y_ref[...] = (jnp.dot(hs_ref[...], wr_ref[...],
                          preferred_element_type=jnp.float32) + br_ref[...])


# ----------------------------------------------------------------------------
# Parameter preparation (done once, outside the hot path)
# ----------------------------------------------------------------------------
def prepare_params(params):
    """Reorder gates [i|f|g|o] -> [i|f|o|g] and stack layer-1 weights."""
    H = params["wh0"].shape[0]

    def ro(w):  # reorder last axis gate blocks
        return jnp.concatenate(
            [w[..., :2 * H], w[..., 3 * H:4 * H], w[..., 2 * H:3 * H]],
            axis=-1)

    return {
        "wx0": ro(params["wx0"]),
        "wh0": ro(params["wh0"]),
        "b0": ro(params["b0"]),
        "wxh1": jnp.concatenate([ro(params["wx1"]), ro(params["wh1"])],
                                axis=0),
        "b1": ro(params["b1"]),
        "wr": params["wr"],
        "br": params["br"],
    }


# ----------------------------------------------------------------------------
# Wrapper
# ----------------------------------------------------------------------------
@jax.jit
def pred_lstm_forward(x, prepped):
    S, B, I = x.shape
    H = prepped["wh0"].shape[0]
    O = prepped["wr"].shape[1]

    x_flat = x.reshape(S * B, I)
    kernel = functools.partial(_pred_lstm_kernel, seq_len=S, batch=B)

    y_flat = pl.pallas_call(
        kernel,
        out_shape=jax.ShapeDtypeStruct((S * B, O), jnp.float32),
        grid_spec=pltpu.PrefetchScalarGridSpec(
            num_scalar_prefetch=0,
            grid=(1,),
            in_specs=[
                pl.BlockSpec((S * B, I), lambda i: (0, 0)),
                pl.BlockSpec((I, 4 * H), lambda i: (0, 0)),
                pl.BlockSpec((H, 4 * H), lambda i: (0, 0)),
                pl.BlockSpec((1, 4 * H), lambda i: (0, 0)),
                pl.BlockSpec((2 * H, 4 * H), lambda i: (0, 0)),
                pl.BlockSpec((1, 4 * H), lambda i: (0, 0)),
                pl.BlockSpec((H, O), lambda i: (0, 0)),
                pl.BlockSpec((1, O), lambda i: (0, 0)),
            ],
            out_specs=pl.BlockSpec((S * B, O), lambda i: (0, 0)),
            scratch_shapes=[pltpu.VMEM((S * B, H), jnp.float32)],
        ),
        compiler_params=pltpu.CompilerParams(
            dimension_semantics=("arbitrary",)),
    )(x_flat, prepped["wx0"], prepped["wh0"], prepped["b0"],
      prepped["wxh1"], prepped["b1"], prepped["wr"], prepped["br"])

    return y_flat.reshape(S, B, O)


# ----------------------------------------------------------------------------
# Pure-JAX reference (mirrors torch.nn.LSTM + nn.Linear, PyTorch gate order)
# ----------------------------------------------------------------------------
def pred_lstm_reference(x, params):
    S, B, I = x.shape
    H = params["wh0"].shape[0]

    def cell(x_t, h, c, wx, wh, b):
        gates = x_t @ wx + h @ wh + b
        i_g, f_g, g_g, o_g = jnp.split(gates, 4, axis=-1)
        i_g = jax.nn.sigmoid(i_g)
        f_g = jax.nn.sigmoid(f_g)
        g_g = jnp.tanh(g_g)
        o_g = jax.nn.sigmoid(o_g)
        c_new = f_g * c + i_g * g_g
        h_new = o_g * jnp.tanh(c_new)
        return h_new, c_new

    def step(carry, x_t):
        h1, c1, h2, c2 = carry
        h1, c1 = cell(x_t, h1, c1, params["wx0"], params["wh0"], params["b0"])
        h2, c2 = cell(h1, h2, c2, params["wx1"], params["wh1"], params["b1"])
        return (h1, c1, h2, c2), h2

    zeros = jnp.zeros((B, H), jnp.float32)
    _, hs = jax.lax.scan(step, (zeros, zeros, zeros, zeros), x)
    flat = hs.reshape(S * B, H)
    y = flat @ params["wr"] + params["br"]
    return y.reshape(S, B, -1)


# ----------------------------------------------------------------------------
# Deterministic parameter init (PyTorch-style uniform(-1/sqrt(H), 1/sqrt(H)),
# PyTorch gate order [i | f | g | o], biases pre-combined as b_ih + b_hh)
# ----------------------------------------------------------------------------
def init_params(key, input_size, hidden_size, output_size):
    H, I, O = hidden_size, input_size, output_size
    k = 1.0 / jnp.sqrt(jnp.float32(H))
    keys = jax.random.split(key, 10)
    u = lambda kk, shape: jax.random.uniform(kk, shape, jnp.float32, -k, k)
    return {
        # layer 0
        "wx0": u(keys[0], (I, 4 * H)),
        "wh0": u(keys[1], (H, 4 * H)),
        "b0": (u(keys[2], (1, 4 * H)) + u(keys[3], (1, 4 * H))),
        # layer 1
        "wx1": u(keys[4], (H, 4 * H)),
        "wh1": u(keys[5], (H, 4 * H)),
        "b1": (u(keys[6], (1, 4 * H)) + u(keys[7], (1, 4 * H))),
        # regression head
        "wr": u(keys[8], (H, O)),
        "br": u(keys[9], (1, O)),
    }


if __name__ == "__main__":
    SEQ, BATCH, INPUT, HIDDEN, OUTPUT = 8, 2, 4, 32, 1

    key = jax.random.PRNGKey(0)
    k_x, k_p = jax.random.split(key)
    x = jax.random.normal(k_x, (SEQ, BATCH, INPUT), jnp.float32)
    params = init_params(k_p, INPUT, HIDDEN, OUTPUT)
    prepped = prepare_params(params)

    out = pred_lstm_forward(x, prepped)
    out = jax.block_until_ready(out)

    ref = pred_lstm_reference(x, params)
    assert out.shape == (SEQ, BATCH, OUTPUT)
    assert jnp.allclose(out, ref, rtol=1e-4, atol=1e-4)

    print("KERNEL_OK")
</pallas_src>

<mosaic_0001>
module attributes {stable_mosaic.version = 11 : i64} {
  func.func @_pred_lstm_kernel(%arg0: i32, %arg1: memref<16x4xf32, #tpu.memory_space<vmem>>, %arg2: memref<4x128xf32, #tpu.memory_space<vmem>>, %arg3: memref<32x128xf32, #tpu.memory_space<vmem>>, %arg4: memref<1x128xf32, #tpu.memory_space<vmem>>, %arg5: memref<64x128xf32, #tpu.memory_space<vmem>>, %arg6: memref<1x128xf32, #tpu.memory_space<vmem>>, %arg7: memref<32x1xf32, #tpu.memory_space<vmem>>, %arg8: memref<1x1xf32, #tpu.memory_space<vmem>>, %arg9: memref<16x1xf32, #tpu.memory_space<vmem>>, %arg10: memref<16x32xf32, #tpu.memory_space<vmem>>) attributes {dimension_semantics = [#tpu.dimension_semantics<arbitrary>], iteration_bounds = array<i64: 1>, scalar_prefetch = 0 : i64, scratch_operands = 1 : i64, tpu.core_type = #tpu.core_type<tc>, window_params = [{pipeline_mode = #tpu.pipeline_mode<synchronous>, transform_indices = @transform_0, window_bounds = array<i64: 16, 4>}, {pipeline_mode = #tpu.pipeline_mode<synchronous>, transform_indices = @transform_1, window_bounds = array<i64: 4, 128>}, {pipeline_mode = #tpu.pipeline_mode<synchronous>, transform_indices = @transform_2, window_bounds = array<i64: 32, 128>}, {pipeline_mode = #tpu.pipeline_mode<synchronous>, transform_indices = @transform_3, window_bounds = array<i64: 1, 128>}, {pipeline_mode = #tpu.pipeline_mode<synchronous>, transform_indices = @transform_4, window_bounds = array<i64: 64, 128>}, {pipeline_mode = #tpu.pipeline_mode<synchronous>, transform_indices = @transform_5, window_bounds = array<i64: 1, 128>}, {pipeline_mode = #tpu.pipeline_mode<synchronous>, transform_indices = @transform_6, window_bounds = array<i64: 32, 1>}, {pipeline_mode = #tpu.pipeline_mode<synchronous>, transform_indices = @transform_7, window_bounds = array<i64: 1, 1>}, {pipeline_mode = #tpu.pipeline_mode<synchronous>, transform_indices = @transform_8, window_bounds = array<i64: 16, 1>}]} {
    %c0 = arith.constant 0 : index
    %c0_0 = arith.constant 0 : index
    %0 = vector.load %arg1[%c0, %c0_0] : memref<16x4xf32, #tpu.memory_space<vmem>>, vector<16x4xf32>
    %c0_1 = arith.constant 0 : index
    %c0_2 = arith.constant 0 : index
    %1 = vector.load %arg2[%c0_1, %c0_2] : memref<4x128xf32, #tpu.memory_space<vmem>>, vector<4x128xf32>
    %cst = arith.constant dense<0.000000e+00> : vector<16x128xf32>
    %2 = tpu.matmul %0, %1, %cst {dimension_numbers = #tpu.dot_dimension_numbers<[1], [0], [0], [1], [0, 0, 1, 1], [], []>} : vector<16x4xf32>, vector<4x128xf32>, vector<16x128xf32> -> vector<16x128xf32>
    %c0_3 = arith.constant 0 : index
    %c0_4 = arith.constant 0 : index
    %3 = vector.load %arg4[%c0_3, %c0_4] : memref<1x128xf32, #tpu.memory_space<vmem>>, vector<1x128xf32>
    %4 = vector.broadcast %3 : vector<1x128xf32> to vector<16x128xf32>
    %5 = arith.addf %2, %4 : vector<16x128xf32>
    %c0_5 = arith.constant 0 : index
    %c0_6 = arith.constant 0 : index
    %6 = vector.load %arg3[%c0_5, %c0_6] : memref<32x128xf32, #tpu.memory_space<vmem>>, vector<32x128xf32>
    %c0_7 = arith.constant 0 : index
    %c0_8 = arith.constant 0 : index
    %7 = vector.load %arg5[%c0_7, %c0_8] : memref<64x128xf32, #tpu.memory_space<vmem>>, vector<64x128xf32>
    %c0_9 = arith.constant 0 : index
    %c0_10 = arith.constant 0 : index
    %8 = vector.load %arg6[%c0_9, %c0_10] : memref<1x128xf32, #tpu.memory_space<vmem>>, vector<1x128xf32>
    %cst_11 = arith.constant 0.000000e+00 : f32
    %9 = vector.broadcast %cst_11 : f32 to vector<2x32xf32>
    %10 = vector.extract_strided_slice %5 {offsets = [0, 0], sizes = [2, 128], strides = [1, 1]} : vector<16x128xf32> to vector<2x128xf32>
    %cst_12 = arith.constant dense<0.000000e+00> : vector<2x128xf32>
    %11 = tpu.matmul %9, %6, %cst_12 {dimension_numbers = #tpu.dot_dimension_numbers<[1], [0], [0], [1], [0, 0, 1, 1], [], []>} : vector<2x32xf32>, vector<32x128xf32>, vector<2x128xf32> -> vector<2x128xf32>
    %12 = arith.addf %10, %11 : vector<2x128xf32>
    %13 = vector.extract_strided_slice %12 {offsets = [0, 0], sizes = [2, 96], strides = [1, 1]} : vector<2x128xf32> to vector<2x96xf32>
    %14 = arith.negf %13 : vector<2x96xf32>
    %15 = math.exp %14 : vector<2x96xf32>
    %cst_13 = arith.constant 1.000000e+00 : f32
    %16 = vector.broadcast %cst_13 : f32 to vector<2x96xf32>
    %17 = arith.addf %16, %15 : vector<2x96xf32>
    %18 = arith.divf %16, %17 : vector<2x96xf32>
    %19 = vector.extract_strided_slice %12 {offsets = [0, 96], sizes = [2, 32], strides = [1, 1]} : vector<2x128xf32> to vector<2x32xf32>
    %20 = math.tanh %19 : vector<2x32xf32>
    %21 = vector.extract_strided_slice %18 {offsets = [0, 0], sizes = [2, 32], strides = [1, 1]} : vector<2x96xf32> to vector<2x32xf32>
    %22 = vector.extract_strided_slice %18 {offsets = [0, 32], sizes = [2, 32], strides = [1, 1]} : vector<2x96xf32> to vector<2x32xf32>
    %23 = vector.extract_strided_slice %18 {offsets = [0, 64], sizes = [2, 32], strides = [1, 1]} : vector<2x96xf32> to vector<2x32xf32>
    %24 = arith.mulf %22, %9 : vector<2x32xf32>
    %25 = arith.mulf %21, %20 : vector<2x32xf32>
    %26 = arith.addf %24, %25 : vector<2x32xf32>
    %27 = math.tanh %26 : vector<2x32xf32>
    %28 = arith.mulf %23, %27 : vector<2x32xf32>
    %29 = tpu.concatenate %28, %9 in 1 : vector<2x32xf32>, vector<2x32xf32> -> vector<2x64xf32>
    %cst_14 = arith.constant dense<0.000000e+00> : vector<2x128xf32>
    %30 = tpu.matmul %29, %7, %cst_14 {dimension_numbers = #tpu.dot_dimension_numbers<[1], [0], [0], [1], [0, 0, 1, 1], [], []>} : vector<2x64xf32>, vector<64x128xf32>, vector<2x128xf32> -> vector<2x128xf32>
    %31 = vector.broadcast %8 : vector<1x128xf32> to vector<2x128xf32>
    %32 = arith.addf %30, %31 : vector<2x128xf32>
    %33 = vector.extract_strided_slice %32 {offsets = [0, 0], sizes = [2, 96], strides = [1, 1]} : vector<2x128xf32> to vector<2x96xf32>
    %34 = arith.negf %33 : vector<2x96xf32>
    %35 = math.exp %34 : vector<2x96xf32>
    %cst_15 = arith.constant 1.000000e+00 : f32
    %36 = vector.broadcast %cst_15 : f32 to vector<2x96xf32>
    %37 = arith.addf %36, %35 : vector<2x96xf32>
    %38 = arith.divf %36, %37 : vector<2x96xf32>
    %39 = vector.extract_strided_slice %32 {offsets = [0, 96], sizes = [2, 32], strides = [1, 1]} : vector<2x128xf32> to vector<2x32xf32>
    %40 = math.tanh %39 : vector<2x32xf32>
    %41 = vector.extract_strided_slice %38 {offsets = [0, 0], sizes = [2, 32], strides = [1, 1]} : vector<2x96xf32> to vector<2x32xf32>
    %42 = vector.extract_strided_slice %38 {offsets = [0, 32], sizes = [2, 32], strides = [1, 1]} : vector<2x96xf32> to vector<2x32xf32>
    %43 = vector.extract_strided_slice %38 {offsets = [0, 64], sizes = [2, 32], strides = [1, 1]} : vector<2x96xf32> to vector<2x32xf32>
    %44 = arith.mulf %42, %9 : vector<2x32xf32>
    %45 = arith.mulf %41, %40 : vector<2x32xf32>
    %46 = arith.addf %44, %45 : vector<2x32xf32>
    %47 = math.tanh %46 : vector<2x32xf32>
    %48 = arith.mulf %43, %47 : vector<2x32xf32>
    %c0_16 = arith.constant 0 : index
    %c0_17 = arith.constant 0 : index
    %49 = vector.load %arg10[%c0_16, %c0_17] : memref<16x32xf32, #tpu.memory_space<vmem>>, vector<2x32xf32>
    tpu.vector_store %arg10[%c0_16, %c0_17], %48 {strides = array<i32>} : memref<16x32xf32, #tpu.memory_space<vmem>>, vector<2x32xf32>,
    %50 = vector.extract_strided_slice %5 {offsets = [2, 0], sizes = [2, 128], strides = [1, 1]} : vector<16x128xf32> to vector<2x128xf32>
    %cst_18 = arith.constant dense<0.000000e+00> : vector<2x128xf32>
    %51 = tpu.matmul %28, %6, %cst_18 {dimension_numbers = #tpu.dot_dimension_numbers<[1], [0], [0], [1], [0, 0, 1, 1], [], []>} : vector<2x32xf32>, vector<32x128xf32>, vector<2x128xf32> -> vector<2x128xf32>
    %52 = arith.addf %50, %51 : vector<2x128xf32>
    %53 = vector.extract_strided_slice %52 {offsets = [0, 0], sizes = [2, 96], strides = [1, 1]} : vector<2x128xf32> to vector<2x96xf32>
    %54 = arith.negf %53 : vector<2x96xf32>
    %55 = math.exp %54 : vector<2x96xf32>
    %cst_19 = arith.constant 1.000000e+00 : f32
    %56 = vector.broadcast %cst_19 : f32 to vector<2x96xf32>
    %57 = arith.addf %56, %55 : vector<2x96xf32>
    %58 = arith.divf %56, %57 : vector<2x96xf32>
    %59 = vector.extract_strided_slice %52 {offsets = [0, 96], sizes = [2, 32], strides = [1, 1]} : vector<2x128xf32> to vector<2x32xf32>
    %60 = math.tanh %59 : vector<2x32xf32>
    %61 = vector.extract_strided_slice %58 {offsets = [0, 0], sizes = [2, 32], strides = [1, 1]} : vector<2x96xf32> to vector<2x32xf32>
    %62 = vector.extract_strided_slice %58 {offsets = [0, 32], sizes = [2, 32], strides = [1, 1]} : vector<2x96xf32> to vector<2x32xf32>
    %63 = vector.extract_strided_slice %58 {offsets = [0, 64], sizes = [2, 32], strides = [1, 1]} : vector<2x96xf32> to vector<2x32xf32>
    %64 = arith.mulf %62, %26 : vector<2x32xf32>
    %65 = arith.mulf %61, %60 : vector<2x32xf32>
    %66 = arith.addf %64, %65 : vector<2x32xf32>
    %67 = math.tanh %66 : vector<2x32xf32>
    %68 = arith.mulf %63, %67 : vector<2x32xf32>
    %69 = tpu.concatenate %68, %48 in 1 : vector<2x32xf32>, vector<2x32xf32> -> vector<2x64xf32>
    %cst_20 = arith.constant dense<0.000000e+00> : vector<2x128xf32>
    %70 = tpu.matmul %69, %7, %cst_20 {dimension_numbers = #tpu.dot_dimension_numbers<[1], [0], [0], [1], [0, 0, 1, 1], [], []>} : vector<2x64xf32>, vector<64x128xf32>, vector<2x128xf32> -> vector<2x128xf32>
    %71 = vector.broadcast %8 : vector<1x128xf32> to vector<2x128xf32>
    %72 = arith.addf %70, %71 : vector<2x128xf32>
    %73 = vector.extract_strided_slice %72 {offsets = [0, 0], sizes = [2, 96], strides = [1, 1]} : vector<2x128xf32> to vector<2x96xf32>
    %74 = arith.negf %73 : vector<2x96xf32>
    %75 = math.exp %74 : vector<2x96xf32>
    %cst_21 = arith.constant 1.000000e+00 : f32
    %76 = vector.broadcast %cst_21 : f32 to vector<2x96xf32>
    %77 = arith.addf %76, %75 : vector<2x96xf32>
    %78 = arith.divf %76, %77 : vector<2x96xf32>
    %79 = vector.extract_strided_slice %72 {offsets = [0, 96], sizes = [2, 32], strides = [1, 1]} : vector<2x128xf32> to vector<2x32xf32>
    %80 = math.tanh %79 : vector<2x32xf32>
    %81 = vector.extract_strided_slice %78 {offsets = [0, 0], sizes = [2, 32], strides = [1, 1]} : vector<2x96xf32> to vector<2x32xf32>
    %82 = vector.extract_strided_slice %78 {offsets = [0, 32], sizes = [2, 32], strides = [1, 1]} : vector<2x96xf32> to vector<2x32xf32>
    %83 = vector.extract_strided_slice %78 {offsets = [0, 64], sizes = [2, 32], strides = [1, 1]} : vector<2x96xf32> to vector<2x32xf32>
    %84 = arith.mulf %82, %46 : vector<2x32xf32>
    %85 = arith.mulf %81, %80 : vector<2x32xf32>
    %86 = arith.addf %84, %85 : vector<2x32xf32>
    %87 = math.tanh %86 : vector<2x32xf32>
    %88 = arith.mulf %83, %87 : vector<2x32xf32>
    %c2 = arith.constant 2 : index
    %c0_22 = arith.constant 0 : index
    %89 = vector.load %arg10[%c2, %c0_22] : memref<16x32xf32, #tpu.memory_space<vmem>>, vector<2x32xf32>
    tpu.vector_store %arg10[%c2, %c0_22], %88 {strides = array<i32>} : memref<16x32xf32, #tpu.memory_space<vmem>>, vector<2x32xf32>,
    %90 = vector.extract_strided_slice %5 {offsets = [4, 0], sizes = [2, 128], strides = [1, 1]} : vector<16x128xf32> to vector<2x128xf32>
    %cst_23 = arith.constant dense<0.000000e+00> : vector<2x128xf32>
    %91 = tpu.matmul %68, %6, %cst_23 {dimension_numbers = #tpu.dot_dimension_numbers<[1], [0], [0], [1], [0, 0, 1, 1], [], []>} : vector<2x32xf32>, vector<32x128xf32>, vector<2x128xf32> -> vector<2x128xf32>
    %92 = arith.addf %90, %91 : vector<2x128xf32>
    %93 = vector.extract_strided_slice %92 {offsets = [0, 0], sizes = [2, 96], strides = [1, 1]} : vector<2x128xf32> to vector<2x96xf32>
    %94 = arith.negf %93 : vector<2x96xf32>
    %95 = math.exp %94 : vector<2x96xf32>
    %cst_24 = arith.constant 1.000000e+00 : f32
    %96 = vector.broadcast %cst_24 : f32 to vector<2x96xf32>
    %97 = arith.addf %96, %95 : vector<2x96xf32>
    %98 = arith.divf %96, %97 : vector<2x96xf32>
    %99 = vector.extract_strided_slice %92 {offsets = [0, 96], sizes = [2, 32], strides = [1, 1]} : vector<2x128xf32> to vector<2x32xf32>
    %100 = math.tanh %99 : vector<2x32xf32>
    %101 = vector.extract_strided_slice %98 {offsets = [0, 0], sizes = [2, 32], strides = [1, 1]} : vector<2x96xf32> to vector<2x32xf32>
    %102 = vector.extract_strided_slice %98 {offsets = [0, 32], sizes = [2, 32], strides = [1, 1]} : vector<2x96xf32> to vector<2x32xf32>
    %103 = vector.extract_strided_slice %98 {offsets = [0, 64], sizes = [2, 32], strides = [1, 1]} : vector<2x96xf32> to vector<2x32xf32>
    %104 = arith.mulf %102, %66 : vector<2x32xf32>
    %105 = arith.mulf %101, %100 : vector<2x32xf32>
    %106 = arith.addf %104, %105 : vector<2x32xf32>
    %107 = math.tanh %106 : vector<2x32xf32>
    %108 = arith.mulf %103, %107 : vector<2x32xf32>
    %109 = tpu.concatenate %108, %88 in 1 : vector<2x32xf32>, vector<2x32xf32> -> vector<2x64xf32>
    %cst_25 = arith.constant dense<0.000000e+00> : vector<2x128xf32>
    %110 = tpu.matmul %109, %7, %cst_25 {dimension_numbers = #tpu.dot_dimension_numbers<[1], [0], [0], [1], [0, 0, 1, 1], [], []>} : vector<2x64xf32>, vector<64x128xf32>, vector<2x128xf32> -> vector<2x128xf32>
    %111 = vector.broadcast %8 : vector<1x128xf32> to vector<2x128xf32>
    %112 = arith.addf %110, %111 : vector<2x128xf32>
    %113 = vector.extract_strided_slice %112 {offsets = [0, 0], sizes = [2, 96], strides = [1, 1]} : vector<2x128xf32> to vector<2x96xf32>
    %114 = arith.negf %113 : vector<2x96xf32>
    %115 = math.exp %114 : vector<2x96xf32>
    %cst_26 = arith.constant 1.000000e+00 : f32
    %116 = vector.broadcast %cst_26 : f32 to vector<2x96xf32>
    %117 = arith.addf %116, %115 : vector<2x96xf32>
    %118 = arith.divf %116, %117 : vector<2x96xf32>
    %119 = vector.extract_strided_slice %112 {offsets = [0, 96], sizes = [2, 32], strides = [1, 1]} : vector<2x128xf32> to vector<2x32xf32>
    %120 = math.tanh %119 : vector<2x32xf32>
    %121 = vector.extract_strided_slice %118 {offsets = [0, 0], sizes = [2, 32], strides = [1, 1]} : vector<2x96xf32> to vector<2x32xf32>
    %122 = vector.extract_strided_slice %118 {offsets = [0, 32], sizes = [2, 32], strides = [1, 1]} : vector<2x96xf32> to vector<2x32xf32>
    %123 = vector.extract_strided_slice %118 {offsets = [0, 64], sizes = [2, 32], strides = [1, 1]} : vector<2x96xf32> to vector<2x32xf32>
    %124 = arith.mulf %122, %86 : vector<2x32xf32>
    %125 = arith.mulf %121, %120 : vector<2x32xf32>
    %126 = arith.addf %124, %125 : vector<2x32xf32>
    %127 = math.tanh %126 : vector<2x32xf32>
    %128 = arith.mulf %123, %127 : vector<2x32xf32>
    %c4 = arith.constant 4 : index
    %c0_27 = arith.constant 0 : index
    %129 = vector.load %arg10[%c4, %c0_27] : memref<16x32xf32, #tpu.memory_space<vmem>>, vector<2x32xf32>
    tpu.vector_store %arg10[%c4, %c0_27], %128 {strides = array<i32>} : memref<16x32xf32, #tpu.memory_space<vmem>>, vector<2x32xf32>,
    %130 = vector.extract_strided_slice %5 {offsets = [6, 0], sizes = [2, 128], strides = [1, 1]} : vector<16x128xf32> to vector<2x128xf32>
    %cst_28 = arith.constant dense<0.000000e+00> : vector<2x128xf32>
    %131 = tpu.matmul %108, %6, %cst_28 {dimension_numbers = #tpu.dot_dimension_numbers<[1], [0], [0], [1], [0, 0, 1, 1], [], []>} : vector<2x32xf32>, vector<32x128xf32>, vector<2x128xf32> -> vector<2x128xf32>
    %132 = arith.addf %130, %131 : vector<2x128xf32>
    %133 = vector.extract_strided_slice %132 {offsets = [0, 0], sizes = [2, 96], strides = [1, 1]} : vector<2x128xf32> to vector<2x96xf32>
    %134 = arith.negf %133 : vector<2x96xf32>
    %135 = math.exp %134 : vector<2x96xf32>
    %cst_29 = arith.constant 1.000000e+00 : f32
    %136 = vector.broadcast %cst_29 : f32 to vector<2x96xf32>
    %137 = arith.addf %136, %135 : vector<2x96xf32>
    %138 = arith.divf %136, %137 : vector<2x96xf32>
    %139 = vector.extract_strided_slice %132 {offsets = [0, 96], sizes = [2, 32], strides = [1, 1]} : vector<2x128xf32> to vector<2x32xf32>
    %140 = math.tanh %139 : vector<2x32xf32>
    %141 = vector.extract_strided_slice %138 {offsets = [0, 0], sizes = [2, 32], strides = [1, 1]} : vector<2x96xf32> to vector<2x32xf32>
    %142 = vector.extract_strided_slice %138 {offsets = [0, 32], sizes = [2, 32], strides = [1, 1]} : vector<2x96xf32> to vector<2x32xf32>
    %143 = vector.extract_strided_slice %138 {offsets = [0, 64], sizes = [2, 32], strides = [1, 1]} : vector<2x96xf32> to vector<2x32xf32>
    %144 = arith.mulf %142, %106 : vector<2x32xf32>
    %145 = arith.mulf %141, %140 : vector<2x32xf32>
    %146 = arith.addf %144, %145 : vector<2x32xf32>
    %147 = math.tanh %146 : vector<2x32xf32>
    %148 = arith.mulf %143, %147 : vector<2x32xf32>
    %149 = tpu.concatenate %148, %128 in 1 : vector<2x32xf32>, vector<2x32xf32> -> vector<2x64xf32>
    %cst_30 = arith.constant dense<0.000000e+00> : vector<2x128xf32>
    %150 = tpu.matmul %149, %7, %cst_30 {dimension_numbers = #tpu.dot_dimension_numbers<[1], [0], [0], [1], [0, 0, 1, 1], [], []>} : vector<2x64xf32>, vector<64x128xf32>, vector<2x128xf32> -> vector<2x128xf32>
    %151 = vector.broadcast %8 : vector<1x128xf32> to vector<2x128xf32>
    %152 = arith.addf %150, %151 : vector<2x128xf32>
    %153 = vector.extract_strided_slice %152 {offsets = [0, 0], sizes = [2, 96], strides = [1, 1]} : vector<2x128xf32> to vector<2x96xf32>
    %154 = arith.negf %153 : vector<2x96xf32>
    %155 = math.exp %154 : vector<2x96xf32>
    %cst_31 = arith.constant 1.000000e+00 : f32
    %156 = vector.broadcast %cst_31 : f32 to vector<2x96xf32>
    %157 = arith.addf %156, %155 : vector<2x96xf32>
    %158 = arith.divf %156, %157 : vector<2x96xf32>
    %159 = vector.extract_strided_slice %152 {offsets = [0, 96], sizes = [2, 32], strides = [1, 1]} : vector<2x128xf32> to vector<2x32xf32>
    %160 = math.tanh %159 : vector<2x32xf32>
    %161 = vector.extract_strided_slice %158 {offsets = [0, 0], sizes = [2, 32], strides = [1, 1]} : vector<2x96xf32> to vector<2x32xf32>
    %162 = vector.extract_strided_slice %158 {offsets = [0, 32], sizes = [2, 32], strides = [1, 1]} : vector<2x96xf32> to vector<2x32xf32>
    %163 = vector.extract_strided_slice %158 {offsets = [0, 64], sizes = [2, 32], strides = [1, 1]} : vector<2x96xf32> to vector<2x32xf32>
    %164 = arith.mulf %162, %126 : vector<2x32xf32>
    %165 = arith.mulf %161, %160 : vector<2x32xf32>
    %166 = arith.addf %164, %165 : vector<2x32xf32>
    %167 = math.tanh %166 : vector<2x32xf32>
    %168 = arith.mulf %163, %167 : vector<2x32xf32>
    %c6 = arith.constant 6 : index
    %c0_32 = arith.constant 0 : index
    %169 = vector.load %arg10[%c6, %c0_32] : memref<16x32xf32, #tpu.memory_space<vmem>>, vector<2x32xf32>
    tpu.vector_store %arg10[%c6, %c0_32], %168 {strides = array<i32>} : memref<16x32xf32, #tpu.memory_space<vmem>>, vector<2x32xf32>,
    %170 = vector.extract_strided_slice %5 {offsets = [8, 0], sizes = [2, 128], strides = [1, 1]} : vector<16x128xf32> to vector<2x128xf32>
    %cst_33 = arith.constant dense<0.000000e+00> : vector<2x128xf32>
    %171 = tpu.matmul %148, %6, %cst_33 {dimension_numbers = #tpu.dot_dimension_numbers<[1], [0], [0], [1], [0, 0, 1, 1], [], []>} : vector<2x32xf32>, vector<32x128xf32>, vector<2x128xf32> -> vector<2x128xf32>
    %172 = arith.addf %170, %171 : vector<2x128xf32>
    %173 = vector.extract_strided_slice %172 {offsets = [0, 0], sizes = [2, 96], strides = [1, 1]} : vector<2x128xf32> to vector<2x96xf32>
    %174 = arith.negf %173 : vector<2x96xf32>
    %175 = math.exp %174 : vector<2x96xf32>
    %cst_34 = arith.constant 1.000000e+00 : f32
    %176 = vector.broadcast %cst_34 : f32 to vector<2x96xf32>
    %177 = arith.addf %176, %175 : vector<2x96xf32>
    %178 = arith.divf %176, %177 : vector<2x96xf32>
    %179 = vector.extract_strided_slice %172 {offsets = [0, 96], sizes = [2, 32], strides = [1, 1]} : vector<2x128xf32> to vector<2x32xf32>
    %180 = math.tanh %179 : vector<2x32xf32>
    %181 = vector.extract_strided_slice %178 {offsets = [0, 0], sizes = [2, 32], strides = [1, 1]} : vector<2x96xf32> to vector<2x32xf32>
    %182 = vector.extract_strided_slice %178 {offsets = [0, 32], sizes = [2, 32], strides = [1, 1]} : vector<2x96xf32> to vector<2x32xf32>
    %183 = vector.extract_strided_slice %178 {offsets = [0, 64], sizes = [2, 32], strides = [1, 1]} : vector<2x96xf32> to vector<2x32xf32>
    %184 = arith.mulf %182, %146 : vector<2x32xf32>
    %185 = arith.mulf %181, %180 : vector<2x32xf32>
    %186 = arith.addf %184, %185 : vector<2x32xf32>
    %187 = math.tanh %186 : vector<2x32xf32>
    %188 = arith.mulf %183, %187 : vector<2x32xf32>
    %189 = tpu.concatenate %188, %168 in 1 : vector<2x32xf32>, vector<2x32xf32> -> vector<2x64xf32>
    %cst_35 = arith.constant dense<0.000000e+00> : vector<2x128xf32>
    %190 = tpu.matmul %189, %7, %cst_35 {dimension_numbers = #tpu.dot_dimension_numbers<[1], [0], [0], [1], [0, 0, 1, 1], [], []>} : vector<2x64xf32>, vector<64x128xf32>, vector<2x128xf32> -> vector<2x128xf32>
    %191 = vector.broadcast %8 : vector<1x128xf32> to vector<2x128xf32>
    %192 = arith.addf %190, %191 : vector<2x128xf32>
    %193 = vector.extract_strided_slice %192 {offsets = [0, 0], sizes = [2, 96], strides = [1, 1]} : vector<2x128xf32> to vector<2x96xf32>
    %194 = arith.negf %193 : vector<2x96xf32>
    %195 = math.exp %194 : vector<2x96xf32>
    %cst_36 = arith.constant 1.000000e+00 : f32
    %196 = vector.broadcast %cst_36 : f32 to vector<2x96xf32>
    %197 = arith.addf %196, %195 : vector<2x96xf32>
    %198 = arith.divf %196, %197 : vector<2x96xf32>
    %199 = vector.extract_strided_slice %192 {offsets = [0, 96], sizes = [2, 32], strides = [1, 1]} : vector<2x128xf32> to vector<2x32xf32>
    %200 = math.tanh %199 : vector<2x32xf32>
    %201 = vector.extract_strided_slice %198 {offsets = [0, 0], sizes = [2, 32], strides = [1, 1]} : vector<2x96xf32> to vector<2x32xf32>
    %202 = vector.extract_strided_slice %198 {offsets = [0, 32], sizes = [2, 32], strides = [1, 1]} : vector<2x96xf32> to vector<2x32xf32>
    %203 = vector.extract_strided_slice %198 {offsets = [0, 64], sizes = [2, 32], strides = [1, 1]} : vector<2x96xf32> to vector<2x32xf32>
    %204 = arith.mulf %202, %166 : vector<2x32xf32>
    %205 = arith.mulf %201, %200 : vector<2x32xf32>
    %206 = arith.addf %204, %205 : vector<2x32xf32>
    %207 = math.tanh %206 : vector<2x32xf32>
    %208 = arith.mulf %203, %207 : vector<2x32xf32>
    %c8 = arith.constant 8 : index
    %c0_37 = arith.constant 0 : index
    %209 = vector.load %arg10[%c8, %c0_37] : memref<16x32xf32, #tpu.memory_space<vmem>>, vector<2x32xf32>
    tpu.vector_store %arg10[%c8, %c0_37], %208 {strides = array<i32>} : memref<16x32xf32, #tpu.memory_space<vmem>>, vector<2x32xf32>,
    %210 = vector.extract_strided_slice %5 {offsets = [10, 0], sizes = [2, 128], strides = [1, 1]} : vector<16x128xf32> to vector<2x128xf32>
    %cst_38 = arith.constant dense<0.000000e+00> : vector<2x128xf32>
    %211 = tpu.matmul %188, %6, %cst_38 {dimension_numbers = #tpu.dot_dimension_numbers<[1], [0], [0], [1], [0, 0, 1, 1], [], []>} : vector<2x32xf32>, vector<32x128xf32>, vector<2x128xf32> -> vector<2x128xf32>
    %212 = arith.addf %210, %211 : vector<2x128xf32>
    %213 = vector.extract_strided_slice %212 {offsets = [0, 0], sizes = [2, 96], strides = [1, 1]} : vector<2x128xf32> to vector<2x96xf32>
    %214 = arith.negf %213 : vector<2x96xf32>
    %215 = math.exp %214 : vector<2x96xf32>
    %cst_39 = arith.constant 1.000000e+00 : f32
    %216 = vector.broadcast %cst_39 : f32 to vector<2x96xf32>
    %217 = arith.addf %216, %215 : vector<2x96xf32>
    %218 = arith.divf %216, %217 : vector<2x96xf32>
    %219 = vector.extract_strided_slice %212 {offsets = [0, 96], sizes = [2, 32], strides = [1, 1]} : vector<2x128xf32> to vector<2x32xf32>
    %220 = math.tanh %219 : vector<2x32xf32>
    %221 = vector.extract_strided_slice %218 {offsets = [0, 0], sizes = [2, 32], strides = [1, 1]} : vector<2x96xf32> to vector<2x32xf32>
    %222 = vector.extract_strided_slice %218 {offsets = [0, 32], sizes = [2, 32], strides = [1, 1]} : vector<2x96xf32> to vector<2x32xf32>
    %223 = vector.extract_strided_slice %218 {offsets = [0, 64], sizes = [2, 32], strides = [1, 1]} : vector<2x96xf32> to vector<2x32xf32>
    %224 = arith.mulf %222, %186 : vector<2x32xf32>
    %225 = arith.mulf %221, %220 : vector<2x32xf32>
    %226 = arith.addf %224, %225 : vector<2x32xf32>
    %227 = math.tanh %226 : vector<2x32xf32>
    %228 = arith.mulf %223, %227 : vector<2x32xf32>
    %229 = tpu.concatenate %228, %208 in 1 : vector<2x32xf32>, vector<2x32xf32> -> vector<2x64xf32>
    %cst_40 = arith.constant dense<0.000000e+00> : vector<2x128xf32>
    %230 = tpu.matmul %229, %7, %cst_40 {dimension_numbers = #tpu.dot_dimension_numbers<[1], [0], [0], [1], [0, 0, 1, 1], [], []>} : vector<2x64xf32>, vector<64x128xf32>, vector<2x128xf32> -> vector<2x128xf32>
    %231 = vector.broadcast %8 : vector<1x128xf32> to vector<2x128xf32>
    %232 = arith.addf %230, %231 : vector<2x128xf32>
    %233 = vector.extract_strided_slice %232 {offsets = [0, 0], sizes = [2, 96], strides = [1, 1]} : vector<2x128xf32> to vector<2x96xf32>
    %234 = arith.negf %233 : vector<2x96xf32>
    %235 = math.exp %234 : vector<2x96xf32>
    %cst_41 = arith.constant 1.000000e+00 : f32
    %236 = vector.broadcast %cst_41 : f32 to vector<2x96xf32>
    %237 = arith.addf %236, %235 : vector<2x96xf32>
    %238 = arith.divf %236, %237 : vector<2x96xf32>
    %239 = vector.extract_strided_slice %232 {offsets = [0, 96], sizes = [2, 32], strides = [1, 1]} : vector<2x128xf32> to vector<2x32xf32>
    %240 = math.tanh %239 : vector<2x32xf32>
    %241 = vector.extract_strided_slice %238 {offsets = [0, 0], sizes = [2, 32], strides = [1, 1]} : vector<2x96xf32> to vector<2x32xf32>
    %242 = vector.extract_strided_slice %238 {offsets = [0, 32], sizes = [2, 32], strides = [1, 1]} : vector<2x96xf32> to vector<2x32xf32>
    %243 = vector.extract_strided_slice %238 {offsets = [0, 64], sizes = [2, 32], strides = [1, 1]} : vector<2x96xf32> to vector<2x32xf32>
    %244 = arith.mulf %242, %206 : vector<2x32xf32>
    %245 = arith.mulf %241, %240 : vector<2x32xf32>
    %246 = arith.addf %244, %245 : vector<2x32xf32>
    %247 = math.tanh %246 : vector<2x32xf32>
    %248 = arith.mulf %243, %247 : vector<2x32xf32>
    %c10 = arith.constant 10 : index
    %c0_42 = arith.constant 0 : index
    %249 = vector.load %arg10[%c10, %c0_42] : memref<16x32xf32, #tpu.memory_space<vmem>>, vector<2x32xf32>
    tpu.vector_store %arg10[%c10, %c0_42], %248 {strides = array<i32>} : memref<16x32xf32, #tpu.memory_space<vmem>>, vector<2x32xf32>,
    %250 = vector.extract_strided_slice %5 {offsets = [12, 0], sizes = [2, 128], strides = [1, 1]} : vector<16x128xf32> to vector<2x128xf32>
    %cst_43 = arith.constant dense<0.000000e+00> : vector<2x128xf32>
    %251 = tpu.matmul %228, %6, %cst_43 {dimension_numbers = #tpu.dot_dimension_numbers<[1], [0], [0], [1], [0, 0, 1, 1], [], []>} : vector<2x32xf32>, vector<32x128xf32>, vector<2x128xf32> -> vector<2x128xf32>
    %252 = arith.addf %250, %251 : vector<2x128xf32>
    %253 = vector.extract_strided_slice %252 {offsets = [0, 0], sizes = [2, 96], strides = [1, 1]} : vector<2x128xf32> to vector<2x96xf32>
    %254 = arith.negf %253 : vector<2x96xf32>
    %255 = math.exp %254 : vector<2x96xf32>
    %cst_44 = arith.constant 1.000000e+00 : f32
    %256 = vector.broadcast %cst_44 : f32 to vector<2x96xf32>
    %257 = arith.addf %256, %255 : vector<2x96xf32>
    %258 = arith.divf %256, %257 : vector<2x96xf32>
    %259 = vector.extract_strided_slice %252 {offsets = [0, 96], sizes = [2, 32], strides = [1, 1]} : vector<2x128xf32> to vector<2x32xf32>
    %260 = math.tanh %259 : vector<2x32xf32>
    %261 = vector.extract_strided_slice %258 {offsets = [0, 0], sizes = [2, 32], strides = [1, 1]} : vector<2x96xf32> to vector<2x32xf32>
    %262 = vector.extract_strided_slice %258 {offsets = [0, 32], sizes = [2, 32], strides = [1, 1]} : vector<2x96xf32> to vector<2x32xf32>
    %263 = vector.extract_strided_slice %258 {offsets = [0, 64], sizes = [2, 32], strides = [1, 1]} : vector<2x96xf32> to vector<2x32xf32>
    %264 = arith.mulf %262, %226 : vector<2x32xf32>
    %265 = arith.mulf %261, %260 : vector<2x32xf32>
    %266 = arith.addf %264, %265 : vector<2x32xf32>
    %267 = math.tanh %266 : vector<2x32xf32>
    %268 = arith.mulf %263, %267 : vector<2x32xf32>
    %269 = tpu.concatenate %268, %248 in 1 : vector<2x32xf32>, vector<2x32xf32> -> vector<2x64xf32>
    %cst_45 = arith.constant dense<0.000000e+00> : vector<2x128xf32>
    %270 = tpu.matmul %269, %7, %cst_45 {dimension_numbers = #tpu.dot_dimension_numbers<[1], [0], [0], [1], [0, 0, 1, 1], [], []>} : vector<2x64xf32>, vector<64x128xf32>, vector<2x128xf32> -> vector<2x128xf32>
    %271 = vector.broadcast %8 : vector<1x128xf32> to vector<2x128xf32>
    %272 = arith.addf %270, %271 : vector<2x128xf32>
    %273 = vector.extract_strided_slice %272 {offsets = [0, 0], sizes = [2, 96], strides = [1, 1]} : vector<2x128xf32> to vector<2x96xf32>
    %274 = arith.negf %273 : vector<2x96xf32>
    %275 = math.exp %274 : vector<2x96xf32>
    %cst_46 = arith.constant 1.000000e+00 : f32
    %276 = vector.broadcast %cst_46 : f32 to vector<2x96xf32>
    %277 = arith.addf %276, %275 : vector<2x96xf32>
    %278 = arith.divf %276, %277 : vector<2x96xf32>
    %279 = vector.extract_strided_slice %272 {offsets = [0, 96], sizes = [2, 32], strides = [1, 1]} : vector<2x128xf32> to vector<2x32xf32>
    %280 = math.tanh %279 : vector<2x32xf32>
    %281 = vector.extract_strided_slice %278 {offsets = [0, 0], sizes = [2, 32], strides = [1, 1]} : vector<2x96xf32> to vector<2x32xf32>
    %282 = vector.extract_strided_slice %278 {offsets = [0, 32], sizes = [2, 32], strides = [1, 1]} : vector<2x96xf32> to vector<2x32xf32>
    %283 = vector.extract_strided_slice %278 {offsets = [0, 64], sizes = [2, 32], strides = [1, 1]} : vector<2x96xf32> to vector<2x32xf32>
    %284 = arith.mulf %282, %246 : vector<2x32xf32>
    %285 = arith.mulf %281, %280 : vector<2x32xf32>
    %286 = arith.addf %284, %285 : vector<2x32xf32>
    %287 = math.tanh %286 : vector<2x32xf32>
    %288 = arith.mulf %283, %287 : vector<2x32xf32>
    %c12 = arith.constant 12 : index
    %c0_47 = arith.constant 0 : index
    %289 = vector.load %arg10[%c12, %c0_47] : memref<16x32xf32, #tpu.memory_space<vmem>>, vector<2x32xf32>
    tpu.vector_store %arg10[%c12, %c0_47], %288 {strides = array<i32>} : memref<16x32xf32, #tpu.memory_space<vmem>>, vector<2x32xf32>,
    %290 = vector.extract_strided_slice %5 {offsets = [14, 0], sizes = [2, 128], strides = [1, 1]} : vector<16x128xf32> to vector<2x128xf32>
    %cst_48 = arith.constant dense<0.000000e+00> : vector<2x128xf32>
    %291 = tpu.matmul %268, %6, %cst_48 {dimension_numbers = #tpu.dot_dimension_numbers<[1], [0], [0], [1], [0, 0, 1, 1], [], []>} : vector<2x32xf32>, vector<32x128xf32>, vector<2x128xf32> -> vector<2x128xf32>
    %292 = arith.addf %290, %291 : vector<2x128xf32>
    %293 = vector.extract_strided_slice %292 {offsets = [0, 0], sizes = [2, 96], strides = [1, 1]} : vector<2x128xf32> to vector<2x96xf32>
    %294 = arith.negf %293 : vector<2x96xf32>
    %295 = math.exp %294 : vector<2x96xf32>
    %cst_49 = arith.constant 1.000000e+00 : f32
    %296 = vector.broadcast %cst_49 : f32 to vector<2x96xf32>
    %297 = arith.addf %296, %295 : vector<2x96xf32>
    %298 = arith.divf %296, %297 : vector<2x96xf32>
    %299 = vector.extract_strided_slice %292 {offsets = [0, 96], sizes = [2, 32], strides = [1, 1]} : vector<2x128xf32> to vector<2x32xf32>
    %300 = math.tanh %299 : vector<2x32xf32>
    %301 = vector.extract_strided_slice %298 {offsets = [0, 0], sizes = [2, 32], strides = [1, 1]} : vector<2x96xf32> to vector<2x32xf32>
    %302 = vector.extract_strided_slice %298 {offsets = [0, 32], sizes = [2, 32], strides = [1, 1]} : vector<2x96xf32> to vector<2x32xf32>
    %303 = vector.extract_strided_slice %298 {offsets = [0, 64], sizes = [2, 32], strides = [1, 1]} : vector<2x96xf32> to vector<2x32xf32>
    %304 = arith.mulf %302, %266 : vector<2x32xf32>
    %305 = arith.mulf %301, %300 : vector<2x32xf32>
    %306 = arith.addf %304, %305 : vector<2x32xf32>
    %307 = math.tanh %306 : vector<2x32xf32>
    %308 = arith.mulf %303, %307 : vector<2x32xf32>
    %309 = tpu.concatenate %308, %288 in 1 : vector<2x32xf32>, vector<2x32xf32> -> vector<2x64xf32>
    %cst_50 = arith.constant dense<0.000000e+00> : vector<2x128xf32>
    %310 = tpu.matmul %309, %7, %cst_50 {dimension_numbers = #tpu.dot_dimension_numbers<[1], [0], [0], [1], [0, 0, 1, 1], [], []>} : vector<2x64xf32>, vector<64x128xf32>, vector<2x128xf32> -> vector<2x128xf32>
    %311 = vector.broadcast %8 : vector<1x128xf32> to vector<2x128xf32>
    %312 = arith.addf %310, %311 : vector<2x128xf32>
    %313 = vector.extract_strided_slice %312 {offsets = [0, 0], sizes = [2, 96], strides = [1, 1]} : vector<2x128xf32> to vector<2x96xf32>
    %314 = arith.negf %313 : vector<2x96xf32>
    %315 = math.exp %314 : vector<2x96xf32>
    %cst_51 = arith.constant 1.000000e+00 : f32
    %316 = vector.broadcast %cst_51 : f32 to vector<2x96xf32>
    %317 = arith.addf %316, %315 : vector<2x96xf32>
    %318 = arith.divf %316, %317 : vector<2x96xf32>
    %319 = vector.extract_strided_slice %312 {offsets = [0, 96], sizes = [2, 32], strides = [1, 1]} : vector<2x128xf32> to vector<2x32xf32>
    %320 = math.tanh %319 : vector<2x32xf32>
    %321 = vector.extract_strided_slice %318 {offsets = [0, 0], sizes = [2, 32], strides = [1, 1]} : vector<2x96xf32> to vector<2x32xf32>
    %322 = vector.extract_strided_slice %318 {offsets = [0, 32], sizes = [2, 32], strides = [1, 1]} : vector<2x96xf32> to vector<2x32xf32>
    %323 = vector.extract_strided_slice %318 {offsets = [0, 64], sizes = [2, 32], strides = [1, 1]} : vector<2x96xf32> to vector<2x32xf32>
    %324 = arith.mulf %322, %286 : vector<2x32xf32>
    %325 = arith.mulf %321, %320 : vector<2x32xf32>
    %326 = arith.addf %324, %325 : vector<2x32xf32>
    %327 = math.tanh %326 : vector<2x32xf32>
    %328 = arith.mulf %323, %327 : vector<2x32xf32>
    %c14 = arith.constant 14 : index
    %c0_52 = arith.constant 0 : index
    %329 = vector.load %arg10[%c14, %c0_52] : memref<16x32xf32, #tpu.memory_space<vmem>>, vector<2x32xf32>
    tpu.vector_store %arg10[%c14, %c0_52], %328 {strides = array<i32>} : memref<16x32xf32, #tpu.memory_space<vmem>>, vector<2x32xf32>,
    %c0_53 = arith.constant 0 : index
    %c0_54 = arith.constant 0 : index
    %330 = vector.load %arg10[%c0_53, %c0_54] : memref<16x32xf32, #tpu.memory_space<vmem>>, vector<16x32xf32>
    %c0_55 = arith.constant 0 : index
    %c0_56 = arith.constant 0 : index
    %331 = vector.load %arg7[%c0_55, %c0_56] : memref<32x1xf32, #tpu.memory_space<vmem>>, vector<32x1xf32>
    %cst_57 = arith.constant dense<0.000000e+00> : vector<16x1xf32>
    %332 = tpu.matmul %330, %331, %cst_57 {dimension_numbers = #tpu.dot_dimension_numbers<[1], [0], [0], [1], [0, 0, 1, 1], [], []>} : vector<16x32xf32>, vector<32x1xf32>, vector<16x1xf32> -> vector<16x1xf32>
    %c0_58 = arith.constant 0 : index
    %c0_59 = arith.constant 0 : index
    %333 = vector.load %arg8[%c0_58, %c0_59] : memref<1x1xf32, #tpu.memory_space<vmem>>, vector<1x1xf32>
    %334 = vector.broadcast %333 : vector<1x1xf32> to vector<16x1xf32>
    %335 = arith.addf %332, %334 : vector<16x1xf32>
    %c0_60 = arith.constant 0 : index
    %c0_61 = arith.constant 0 : index
    %336 = vector.load %arg9[%c0_60, %c0_61] : memref<16x1xf32, #tpu.memory_space<vmem>>, vector<16x1xf32>
    tpu.vector_store %arg9[%c0_60, %c0_61], %335 {strides = array<i32>} : memref<16x1xf32, #tpu.memory_space<vmem>>, vector<16x1xf32>,
    return
  }
  func.func @transform_0(%arg0: i32) -> (i32, i32) {
    %c0_i32 = arith.constant 0 : i32
    %c0_i32_0 = arith.constant 0 : i32
    %c0_i32_1 = arith.constant 0 : i32
    return %c0_i32, %c0_i32_0 : i32, i32
  }
  func.func @transform_1(%arg0: i32) -> (i32, i32) {
    %c0_i32 = arith.constant 0 : i32
    %c0_i32_0 = arith.constant 0 : i32
    %c0_i32_1 = arith.constant 0 : i32
    return %c0_i32, %c0_i32_0 : i32, i32
  }
  func.func @transform_2(%arg0: i32) -> (i32, i32) {
    %c0_i32 = arith.constant 0 : i32
    %c0_i32_0 = arith.constant 0 : i32
    %c0_i32_1 = arith.constant 0 : i32
    return %c0_i32, %c0_i32_0 : i32, i32
  }
  func.func @transform_3(%arg0: i32) -> (i32, i32) {
    %c0_i32 = arith.constant 0 : i32
    %c0_i32_0 = arith.constant 0 : i32
    %c0_i32_1 = arith.constant 0 : i32
    return %c0_i32, %c0_i32_0 : i32, i32
  }
  func.func @transform_4(%arg0: i32) -> (i32, i32) {
    %c0_i32 = arith.constant 0 : i32
    %c0_i32_0 = arith.constant 0 : i32
    %c0_i32_1 = arith.constant 0 : i32
    return %c0_i32, %c0_i32_0 : i32, i32
  }
  func.func @transform_5(%arg0: i32) -> (i32, i32) {
    %c0_i32 = arith.constant 0 : i32
    %c0_i32_0 = arith.constant 0 : i32
    %c0_i32_1 = arith.constant 0 : i32
    return %c0_i32, %c0_i32_0 : i32, i32
  }
  func.func @transform_6(%arg0: i32) -> (i32, i32) {
    %c0_i32 = arith.constant 0 : i32
    %c0_i32_0 = arith.constant 0 : i32
    %c0_i32_1 = arith.constant 0 : i32
    return %c0_i32, %c0_i32_0 : i32, i32
  }
  func.func @transform_7(%arg0: i32) -> (i32, i32) {
    %c0_i32 = arith.constant 0 : i32
    %c0_i32_0 = arith.constant 0 : i32
    %c0_i32_1 = arith.constant 0 : i32
    return %c0_i32, %c0_i32_0 : i32, i32
  }
  func.func @transform_8(%arg0: i32) -> (i32, i32) {
    %c0_i32 = arith.constant 0 : i32
    %c0_i32_0 = arith.constant 0 : i32
    %c0_i32_1 = arith.constant 0 : i32
    return %c0_i32, %c0_i32_0 : i32, i32
  }
}

</mosaic_0001>

<llo_original>
// kernel: pred_lstm_forward.1
$region0: #{pred_lstm_forward.1}
  #allocation0 [shape = 'u32[]', space=smem, size = 0x4, offset = 0x4, fixed_abs, tag = 'smem constant byte address 0x4 - core index']
  #allocation1 [shape = 'u32[72,128]{1,0:T(1,128)}', space=vmem, size = 0x9000, scoped, tag = 'internal scratch']
  #allocation2 [shape = 'f32[16,32]{1,0:T(8,128)}', space=vmem, size = 0x2000, scoped, tag = 'scratch operand']
  #allocation3 [shape = 'f32[1,1]{1,0:T(1,128)S(1)}', space=vmem, size = 0x200, scoped, tag = 'scoped memory for pred_lstm_forward.1']
  %s0 = inlined_call_operand.vmem [shape: f32[16,4], index: 0, kind: input, shape index: {}]
  %s1 = inlined_call_operand.vmem [shape: f32[4,128], index: 1, kind: input, shape index: {}]
  %s2 = inlined_call_operand.vmem [shape: f32[32,128], index: 2, kind: input, shape index: {}]
  %s3 = inlined_call_operand.vmem [shape: f32[1,128], index: 3, kind: input, shape index: {}]
  %s4 = inlined_call_operand.hbm [shape: f32[64,128], index: 4, kind: input, shape index: {}]
  %s5 = inlined_call_operand.vmem [shape: f32[1,128], index: 5, kind: input, shape index: {}]
  %s6 = inlined_call_operand.vmem [shape: f32[32,1], index: 6, kind: input, shape index: {}]
  %s7 = inlined_call_operand.<no memory space> [shape: f32[1,1], index: 7, kind: input, shape index: {}]
  %s8 = inlined_call_operand.vmem [shape: f32[16,1], index: 8, kind: output, shape index: {}]
  %s9 = sld [smem:[#allocation0]]
  $region46: #{pred_lstm_forward.1} parent=0
    _
  %s11 = ssub.s32 1, %s9
  %s12 = scalar_select 0, %s11, %s9
  %v13 = vstv %s7
  %14 = vst [vmem:[#allocation3] sm:$0x1] %v13
  $region1: #{pred_lstm_forward.1} parent=0
    #allocation4 [shape = 'u8[32768]{0}', space=vmem, size = 0x8000, scoped, tag = 'input window, operand 4, single buffered']
    #allocation5 [shape = 's32[1]{0}', space=sflag, size = 0x4, scoped, tag = 'scoped memory for pred_lstm_forward.1']
    %15 = vsyncpa [#allocation5], 0
    // Predicated region
    $region2: #{pred_lstm_forward.1} parent=1 // pred_check
      _
    $region3: #{pred_lstm_forward.1} parent=1 // pred_check_branch
      %17 = sbr.rel (0) target = $region5
    $region4: #{pred_lstm_forward.1} parent=1 // pred_region
      _
    $region5: #{pred_lstm_forward.1} parent=1 // pred_fallthru
      _
    // Predicated region
    $region6: #{pred_lstm_forward.1} parent=1 // pred_check
      _
    $region7: #{pred_lstm_forward.1} parent=1 // pred_check_branch
      %19 = sbr.rel (0) target = $region9
    $region8: #{pred_lstm_forward.1} parent=1 // pred_region
      _
    $region9: #{pred_lstm_forward.1} parent=1 // pred_fallthru
      _
    // Predicated region
    $region10: #{pred_lstm_forward.1} parent=1 // pred_check
      _
    $region11: #{pred_lstm_forward.1} parent=1 // pred_check_branch
      %21 = sbr.rel (0) target = $region13
    $region12: #{pred_lstm_forward.1} parent=1 // pred_region
      _
    $region13: #{pred_lstm_forward.1} parent=1 // pred_fallthru
      _
    // Predicated region
    $region14: #{pred_lstm_forward.1} parent=1 // pred_check
      _
    $region15: #{pred_lstm_forward.1} parent=1 // pred_check_branch
      %23 = sbr.rel (0) target = $region17
    $region16: #{pred_lstm_forward.1} parent=1 // pred_region
      _
    $region17: #{pred_lstm_forward.1} parent=1 // pred_fallthru
      _
    // Predicated region
    $region18: #{pred_lstm_forward.1} parent=1 // pred_check
      _
    $region19: #{pred_lstm_forward.1} parent=1 // pred_check_branch
      %25 = sbr.rel (0) target = $region21
    $region20: #{pred_lstm_forward.1} parent=1 // pred_region
      %27 = vsyncadd [#allocation5], 0
      %s28 = sshll.u32 %s4, 4
      %s29 = int_to_ptr.hbm [resolvable:$true] %s28
      %s30 = sshll.u32 [#allocation4], 4
      %s31 = int_to_ptr.vmem [resolvable:$true] %s30
      %36 = dma.hbm_to_vmem [thread:$0]  %s29, 1024, %s31, [#allocation5], 128, 128, 8
    $region21: #{pred_lstm_forward.1} parent=1 // pred_fallthru
      _
    // Predicated region
    $region22: #{pred_lstm_forward.1} parent=1 // pred_check
      _
    $region23: #{pred_lstm_forward.1} parent=1 // pred_check_branch
      %38 = sbr.rel (0) target = $region25
    $region24: #{pred_lstm_forward.1} parent=1 // pred_region
      _
    $region25: #{pred_lstm_forward.1} parent=1 // pred_fallthru
      _
    // Predicated region
    $region26: #{pred_lstm_forward.1} parent=1 // pred_check
      _
    $region27: #{pred_lstm_forward.1} parent=1 // pred_check_branch
      %40 = sbr.rel (0) target = $region29
    $region28: #{pred_lstm_forward.1} parent=1 // pred_region
      _
    $region29: #{pred_lstm_forward.1} parent=1 // pred_fallthru
      _
    // Predicated region
    $region30: #{pred_lstm_forward.1} parent=1 // pred_check
      _
    $region31: #{pred_lstm_forward.1} parent=1 // pred_check_branch
      %42 = sbr.rel (0) target = $region33
    $region32: #{pred_lstm_forward.1} parent=1 // pred_region
      _
    $region33: #{pred_lstm_forward.1} parent=1 // pred_fallthru
      _
    // Predicated region
    $region34: #{pred_lstm_forward.1} parent=1 // pred_check
      _
    $region35: #{pred_lstm_forward.1} parent=1 // pred_check_branch
      %44 = sbr.rel (0) target = $region37
    $region36: #{pred_lstm_forward.1} parent=1 // pred_region
      %46 = dma.done [#allocation5], 1024
    $region37: #{pred_lstm_forward.1} parent=1 // pred_fallthru
      _
    %v47 = vld [vmem:[%s0] sm:$0xff]
    %v48 = vld [vmem:[%s0 + $0x8] sm:$0xff]
    %v49 = vld [vmem:[%s1] sm:$0xf]
    %v50 = vld [vmem:[%s3] sm:$0x1]
    %v52 = vperm.slane %v50, 0
    %vm54 = vcmask 31744
    %v56 = vsel %vm54, %v47, 0
    %v59 = vsel %vm54, %v48, 0
    %vm61 = vcmask 1043456
    %v63 = vsel %vm61, %v49, 0
    %65 = vmatpush.msra.mxu0 0.0
    %66 = vmatpush.msra.mxu0 0.0
    %67 = vmatpush.msra.mxu0 0.0
    %68 = vmatpush.msra.mxu0 0.0
    %69 = vmatpush.msra.mxu0 0.0
    %70 = vmatpush.msra.mxu0 0.0
    %71 = vmatpush.msra.mxu0 0.0
    %72 = vmatpush.msra.mxu0 0.0
    %73 = vmatpush.msra.mxu0 0.0
    %74 = vmatpush.msra.mxu0 0.0
    %75 = vmatpush.msra.mxu0 0.0
    %76 = vmatpush.msra.mxu0 0.0
    %77 = vmatpush.msra.mxu0 0.0
    %78 = vmatpush.msra.mxu0 0.0
    %79 = vmatpush.msra.mxu0 0.0
    %80 = vmatpush.msra.mxu0 %v63
    %81 = vmatmul.f32.gmra.mxu0 %v56
    %v82 = vpop.f32.mrf.mxu0
    %v83 = vadd.f32 %v52, %v82
    %84 = vmatmul.f32.gmra.mxu0 %v59
    %v85 = vpop.f32.mrf.mxu0
    %v86 = vadd.f32 %v52, %v85
    %87 = vdwg.mxu0
    %v88 = vld [vmem:[%s2] sm:$0xff]
    %v89 = vld [vmem:[%s2 + $0x8] sm:$0xff]
    %v90 = vld [vmem:[%s2 + $0x10] sm:$0xff]
    %v91 = vld [vmem:[%s2 + $0x18] sm:$0xff]
    %v92 = vld [vmem:[#allocation4] sm:$0xff]
    %v93 = vld [vmem:[#allocation4 + $0x8] sm:$0xff]
    %v94 = vld [vmem:[#allocation4 + $0x10] sm:$0xff]
    %v95 = vld [vmem:[#allocation4 + $0x18] sm:$0xff]
    %v96 = vld [vmem:[#allocation4 + $0x20] sm:$0xff]
    %v97 = vld [vmem:[#allocation4 + $0x28] sm:$0xff]
    %v98 = vld [vmem:[#allocation4 + $0x30] sm:$0xff]
    %v99 = vld [vmem:[#allocation4 + $0x38] sm:$0xff]
    %v100 = vld [vmem:[%s5] sm:$0x1]
    %vm101 = vcmask 261120
    %v103 = vsel %vm101, 0.0, 0
    %105 = vmatpush.msra.mxu0 0.0
    %106 = vmatpush.msra.mxu0 0.0
    %107 = vmatpush.msra.mxu0 0.0
    %108 = vmatpush.msra.mxu0 0.0
    %109 = vmatpush.msra.mxu0 0.0
    %110 = vmatpush.msra.mxu0 0.0
    %111 = vmatpush.msra.mxu0 0.0
    %112 = vmatpush.msra.mxu0 0.0
    %113 = vmatpush.msra.mxu0 0.0
    %114 = vmatpush.msra.mxu0 0.0
    %115 = vmatpush.msra.mxu0 0.0
    %116 = vmatpush.msra.mxu0 0.0
    %117 = vmatpush.msra.mxu0 %v91
    %118 = vmatpush.msra.mxu0 %v90
    %119 = vmatpush.msra.mxu0 %v89
    %120 = vmatpush.msra.mxu0 %v88
    %121 = vmatmul.f32.gmra.mxu0 %v103
    %v122 = vpop.f32.mrf.mxu0
    %v123 = vadd.f32 0.0, %v122
    %124 = vdwg.mxu0
    %v125 = vadd.f32 %v83, %v123
    %v126 = vxor.u32 %v125, 2147483648
    %v127 = vmul.f32 %v126, 1.442695
    %v128 = vpow.pop %v127
    %v129 = vadd.f32 %v128, 1.0
    %v130 = vrcp.pop %v129
    %v131 = vmul.f32 %v129, %v130
    %v132 = vsub.f32 1.0, %v131
    %v133 = vmul.f32 %v130, %v132
    %v134 = vadd.f32 %v130, %v133
    %vm135 = vweird.f32 %v129
    %vm136 = vweird.f32 %v130
    %vm137 = vmor %vm135, %vm136
    %v138 = vsel %vm137, %v130, %v134
    %v139 = vand.u32 2147483647, %v129
    %vm140 = vcmp.eq.f32.partialorder %v139, 8.507059e+37
    %v141 = vand.u32 %v129, 2147483648
    %v142 = vor.u32 1.1754944e-38, %v141
    %v143 = vsel %vm140, %v142, %v138
    %v144 = vmul.f32 1.0, %v143
    %v145 = vtanh.pop %v125
    %v146 = vmul.f32 %v144, 0.0
    %148 = vrot.lane.b32.xlu0 %v145, 32
    %v149 = vpop.permute.xlu0 %148
    %v151 = vmul.f32 %v144, %v149
    %153 = vrot.lane.b32.xlu0 %v151, 32
    %v154 = vpop.permute.xlu0 %153
    %v156 = vadd.f32 %v146, %v154
    %v157 = vtanh.pop %v156
    %159 = vrot.lane.b32.xlu0 %v157, 32
    %v160 = vpop.permute.xlu0 %159
    %v162 = vmul.f32 %v144, %v160
    %164 = vrot.lane.b32.xlu0 %v162, 64
    %v165 = vpop.permute.xlu0 %164
    %v167 = vsel %vm101, %v165, 0.0
    %v169 = vperm.slane %v100, 0
    %vm171 = vcmask 523264
    %v173 = vsel %vm171, %v167, 0
    %175 = vmatpush.msra.mxu0 0.0
    %176 = vmatpush.msra.mxu0 0.0
    %177 = vmatpush.msra.mxu0 0.0
    %178 = vmatpush.msra.mxu0 0.0
    %179 = vmatpush.msra.mxu0 0.0
    %180 = vmatpush.msra.mxu0 0.0
    %181 = vmatpush.msra.mxu0 0.0
    %182 = vmatpush.msra.mxu0 0.0
    %183 = vmatpush.msra.mxu0 %v99
    %184 = vmatpush.msra.mxu0 %v98
    %185 = vmatpush.msra.mxu0 %v97
    %186 = vmatpush.msra.mxu0 %v96
    %187 = vmatpush.msra.mxu0 %v95
    %188 = vmatpush.msra.mxu0 %v94
    %189 = vmatpush.msra.mxu0 %v93
    %190 = vmatpush.msra.mxu0 %v92
    %191 = vmatmul.f32.gmra.mxu0 %v173
    %v192 = vpop.f32.mrf.mxu0
    %v193 = vadd.f32 %v169, %v192
    %194 = vdwg.mxu0
    %v195 = vxor.u32 %v193, 2147483648
    %v196 = vmul.f32 %v195, 1.442695
    %v197 = vpow.pop %v196
    %v198 = vadd.f32 %v197, 1.0
    %v199 = vrcp.pop %v198
    %v200 = vmul.f32 %v198, %v199
    %v201 = vsub.f32 1.0, %v200
    %v202 = vmul.f32 %v199, %v201
    %v203 = vadd.f32 %v199, %v202
    %vm204 = vweird.f32 %v198
    %vm205 = vweird.f32 %v199
    %vm206 = vmor %vm204, %vm205
    %v207 = vsel %vm206, %v199, %v203
    %v208 = vand.u32 2147483647, %v198
    %vm209 = vcmp.eq.f32.partialorder %v208, 8.507059e+37
    %v210 = vand.u32 %v198, 2147483648
    %v211 = vor.u32 1.1754944e-38, %v210
    %v212 = vsel %vm209, %v211, %v207
    %v213 = vmul.f32 1.0, %v212
    %v214 = vtanh.pop %v193
    %v215 = vmul.f32 %v213, 0.0
    %217 = vrot.lane.b32.xlu0 %v214, 32
    %v218 = vpop.permute.xlu0 %217
    %v220 = vmul.f32 %v213, %v218
    %222 = vrot.lane.b32.xlu0 %v220, 32
    %v223 = vpop.permute.xlu0 %222
    %v225 = vadd.f32 %v215, %v223
    %v226 = vtanh.pop %v225
    %228 = vrot.lane.b32.xlu0 %v226, 32
    %v229 = vpop.permute.xlu0 %228
    %v231 = vmul.f32 %v213, %v229
    %233 = vrot.lane.b32.xlu0 %v231, 64
    %v234 = vpop.permute.xlu0 %233
    %vm236 = vcmask 254976
    %237 = vst.msk [vmem:[#allocation2] sm:$0x3] %vm236, %v234
    %v238 = vsel %vm101, %v165, 0
    %240 = vmatpush.msra.mxu0 0.0
    %241 = vmatpush.msra.mxu0 0.0
    %242 = vmatpush.msra.mxu0 0.0
    %243 = vmatpush.msra.mxu0 0.0
    %244 = vmatpush.msra.mxu0 0.0
    %245 = vmatpush.msra.mxu0 0.0
    %246 = vmatpush.msra.mxu0 0.0
    %247 = vmatpush.msra.mxu0 0.0
    %248 = vmatpush.msra.mxu0 0.0
    %249 = vmatpush.msra.mxu0 0.0
    %250 = vmatpush.msra.mxu0 0.0
    %251 = vmatpush.msra.mxu0 0.0
    %252 = vmatpush.msra.mxu0 %v91
    %253 = vmatpush.msra.mxu0 %v90
    %254 = vmatpush.msra.mxu0 %v89
    %255 = vmatpush.msra.mxu0 %v88
    %256 = vmatmul.f32.gmra.mxu0 %v238
    %v257 = vpop.f32.mrf.mxu0
    %v258 = vadd.f32 0.0, %v257
    %259 = vdwg.mxu0
    %v261 = vrot.slane %v258, 6
    %v263 = vadd.f32 %v83, %v261
    %v264 = vxor.u32 %v263, 2147483648
    %v265 = vmul.f32 %v264, 1.442695
    %v266 = vpow.pop %v265
    %v267 = vadd.f32 %v266, 1.0
    %v268 = vrcp.pop %v267
    %v269 = vmul.f32 %v267, %v268
    %v270 = vsub.f32 1.0, %v269
    %v271 = vmul.f32 %v268, %v270
    %v272 = vadd.f32 %v268, %v271
    %vm273 = vweird.f32 %v267
    %vm274 = vweird.f32 %v268
    %vm275 = vmor %vm273, %vm274
    %v276 = vsel %vm275, %v268, %v272
    %v277 = vand.u32 2147483647, %v267
    %vm278 = vcmp.eq.f32.partialorder %v277, 8.507059e+37
    %v279 = vand.u32 %v267, 2147483648
    %v280 = vor.u32 1.1754944e-38, %v279
    %v281 = vsel %vm278, %v280, %v276
    %v282 = vmul.f32 1.0, %v281
    %v283 = vtanh.pop %v263
    %v285 = vrot.slane %v156, 6
    %v287 = vmul.f32 %v282, %v285
    %289 = vrot.lane.b32.xlu0 %v283, 32
    %v290 = vpop.permute.xlu0 %289
    %v292 = vmul.f32 %v282, %v290
    %294 = vrot.lane.b32.xlu0 %v292, 32
    %v295 = vpop.permute.xlu0 %294
    %v297 = vadd.f32 %v287, %v295
    %v298 = vtanh.pop %v297
    %300 = vrot.lane.b32.xlu0 %v298, 32
    %v301 = vpop.permute.xlu0 %300
    %v303 = vmul.f32 %v282, %v301
    %305 = vrot.lane.b32.xlu0 %v303, 64
    %v306 = vpop.permute.xlu0 %305
    %v308 = vrot.slane %v231, 6
    %309 = vrot.lane.b32.xlu0 %v308, 96
    %v310 = vpop.permute.xlu0 %309
    %v312 = vsel %vm101, %v306, %v310
    %v314 = vrot.slane %v312, 2
    %v315 = vsel %vm171, %v314, 0
    %317 = vmatpush.msra.mxu0 0.0
    %318 = vmatpush.msra.mxu0 0.0
    %319 = vmatpush.msra.mxu0 0.0
    %320 = vmatpush.msra.mxu0 0.0
    %321 = vmatpush.msra.mxu0 0.0
    %322 = vmatpush.msra.mxu0 0.0
    %323 = vmatpush.msra.mxu0 0.0
    %324 = vmatpush.msra.mxu0 0.0
    %325 = vmatpush.msra.mxu0 %v99
    %326 = vmatpush.msra.mxu0 %v98
    %327 = vmatpush.msra.mxu0 %v97
    %328 = vmatpush.msra.mxu0 %v96
    %329 = vmatpush.msra.mxu0 %v95
    %330 = vmatpush.msra.mxu0 %v94
    %331 = vmatpush.msra.mxu0 %v93
    %332 = vmatpush.msra.mxu0 %v92
    %333 = vmatmul.f32.gmra.mxu0 %v315
    %v334 = vpop.f32.mrf.mxu0
    %v335 = vadd.f32 %v169, %v334
    %336 = vdwg.mxu0
    %v337 = vxor.u32 %v335, 2147483648
    %v338 = vmul.f32 %v337, 1.442695
    %v339 = vpow.pop %v338
    %v340 = vadd.f32 %v339, 1.0
    %v341 = vrcp.pop %v340
    %v342 = vmul.f32 %v340, %v341
    %v343 = vsub.f32 1.0, %v342
    %v344 = vmul.f32 %v341, %v343
    %v345 = vadd.f32 %v341, %v344
    %vm346 = vweird.f32 %v340
    %vm347 = vweird.f32 %v341
    %vm348 = vmor %vm346, %vm347
    %v349 = vsel %vm348, %v341, %v345
    %v350 = vand.u32 2147483647, %v340
    %vm351 = vcmp.eq.f32.partialorder %v350, 8.507059e+37
    %v352 = vand.u32 %v340, 2147483648
    %v353 = vor.u32 1.1754944e-38, %v352
    %v354 = vsel %vm351, %v353, %v349
    %v355 = vmul.f32 1.0, %v354
    %v356 = vtanh.pop %v335
    %v357 = vmul.f32 %v355, %v225
    %359 = vrot.lane.b32.xlu0 %v356, 32
    %v360 = vpop.permute.xlu0 %359
    %v362 = vmul.f32 %v355, %v360
    %364 = vrot.lane.b32.xlu0 %v362, 32
    %v365 = vpop.permute.xlu0 %364
    %v367 = vadd.f32 %v357, %v365
    %v368 = vtanh.pop %v367
    %370 = vrot.lane.b32.xlu0 %v368, 32
    %v371 = vpop.permute.xlu0 %370
    %v373 = vmul.f32 %v355, %v371
    %375 = vrot.lane.b32.xlu0 %v373, 64
    %v376 = vpop.permute.xlu0 %375
    %378 = vst.msk [vmem:[#allocation2 + $0x2] sm:$0x3] %vm236, %v376
    %v379 = vrot.slane %v303, 2
    %380 = vrot.lane.b32.xlu0 %v379, 64
    %v381 = vpop.permute.xlu0 %380
    %v382 = vsel %vm101, %v381, 0
    %384 = vmatpush.msra.mxu0 0.0
    %385 = vmatpush.msra.mxu0 0.0
    %386 = vmatpush.msra.mxu0 0.0
    %387 = vmatpush.msra.mxu0 0.0
    %388 = vmatpush.msra.mxu0 0.0
    %389 = vmatpush.msra.mxu0 0.0
    %390 = vmatpush.msra.mxu0 0.0
    %391 = vmatpush.msra.mxu0 0.0
    %392 = vmatpush.msra.mxu0 0.0
    %393 = vmatpush.msra.mxu0 0.0
    %394 = vmatpush.msra.mxu0 0.0
    %395 = vmatpush.msra.mxu0 0.0
    %396 = vmatpush.msra.mxu0 %v91
    %397 = vmatpush.msra.mxu0 %v90
    %398 = vmatpush.msra.mxu0 %v89
    %399 = vmatpush.msra.mxu0 %v88
    %400 = vmatmul.f32.gmra.mxu0 %v382
    %v401 = vpop.f32.mrf.mxu0
    %v402 = vadd.f32 0.0, %v401
    %403 = vdwg.mxu0
    %v405 = vrot.slane %v402, 4
    %v407 = vadd.f32 %v83, %v405
    %v408 = vxor.u32 %v407, 2147483648
    %v409 = vmul.f32 %v408, 1.442695
    %v410 = vpow.pop %v409
    %v411 = vadd.f32 %v410, 1.0
    %v412 = vrcp.pop %v411
    %v413 = vmul.f32 %v411, %v412
    %v414 = vsub.f32 1.0, %v413
    %v415 = vmul.f32 %v412, %v414
    %v416 = vadd.f32 %v412, %v415
    %vm417 = vweird.f32 %v411
    %vm418 = vweird.f32 %v412
    %vm419 = vmor %vm417, %vm418
    %v420 = vsel %vm419, %v412, %v416
    %v421 = vand.u32 2147483647, %v411
    %vm422 = vcmp.eq.f32.partialorder %v421, 8.507059e+37
    %v423 = vand.u32 %v411, 2147483648
    %v424 = vor.u32 1.1754944e-38, %v423
    %v425 = vsel %vm422, %v424, %v420
    %v426 = vmul.f32 1.0, %v425
    %v427 = vtanh.pop %v407
    %v429 = vrot.slane %v297, 6
    %v431 = vmul.f32 %v426, %v429
    %433 = vrot.lane.b32.xlu0 %v427, 32
    %v434 = vpop.permute.xlu0 %433
    %v436 = vmul.f32 %v426, %v434
    %438 = vrot.lane.b32.xlu0 %v436, 32
    %v439 = vpop.permute.xlu0 %438
    %v441 = vadd.f32 %v431, %v439
    %v442 = vtanh.pop %v441
    %444 = vrot.lane.b32.xlu0 %v442, 32
    %v445 = vpop.permute.xlu0 %444
    %v447 = vmul.f32 %v426, %v445
    %449 = vrot.lane.b32.xlu0 %v447, 64
    %v450 = vpop.permute.xlu0 %449
    %v452 = vrot.slane %v373, 4
    %453 = vrot.lane.b32.xlu0 %v452, 96
    %v454 = vpop.permute.xlu0 %453
    %v456 = vsel %vm101, %v450, %v454
    %v458 = vrot.slane %v456, 4
    %v459 = vsel %vm171, %v458, 0
    %461 = vmatpush.msra.mxu0 0.0
    %462 = vmatpush.msra.mxu0 0.0
    %463 = vmatpush.msra.mxu0 0.0
    %464 = vmatpush.msra.mxu0 0.0
    %465 = vmatpush.msra.mxu0 0.0
    %466 = vmatpush.msra.mxu0 0.0
    %467 = vmatpush.msra.mxu0 0.0
    %468 = vmatpush.msra.mxu0 0.0
    %469 = vmatpush.msra.mxu0 %v99
    %470 = vmatpush.msra.mxu0 %v98
    %471 = vmatpush.msra.mxu0 %v97
    %472 = vmatpush.msra.mxu0 %v96
    %473 = vmatpush.msra.mxu0 %v95
    %474 = vmatpush.msra.mxu0 %v94
    %475 = vmatpush.msra.mxu0 %v93
    %476 = vmatpush.msra.mxu0 %v92
    %477 = vmatmul.f32.gmra.mxu0 %v459
    %v478 = vpop.f32.mrf.mxu0
    %v479 = vadd.f32 %v169, %v478
    %480 = vdwg.mxu0
    %v481 = vxor.u32 %v479, 2147483648
    %v482 = vmul.f32 %v481, 1.442695
    %v483 = vpow.pop %v482
    %v484 = vadd.f32 %v483, 1.0
    %v485 = vrcp.pop %v484
    %v486 = vmul.f32 %v484, %v485
    %v487 = vsub.f32 1.0, %v486
    %v488 = vmul.f32 %v485, %v487
    %v489 = vadd.f32 %v485, %v488
    %vm490 = vweird.f32 %v484
    %vm491 = vweird.f32 %v485
    %vm492 = vmor %vm490, %vm491
    %v493 = vsel %vm492, %v485, %v489
    %v494 = vand.u32 2147483647, %v484
    %vm495 = vcmp.eq.f32.partialorder %v494, 8.507059e+37
    %v496 = vand.u32 %v484, 2147483648
    %v497 = vor.u32 1.1754944e-38, %v496
    %v498 = vsel %vm495, %v497, %v493
    %v499 = vmul.f32 1.0, %v498
    %v500 = vtanh.pop %v479
    %v501 = vmul.f32 %v499, %v367
    %503 = vrot.lane.b32.xlu0 %v500, 32
    %v504 = vpop.permute.xlu0 %503
    %v506 = vmul.f32 %v499, %v504
    %508 = vrot.lane.b32.xlu0 %v506, 32
    %v509 = vpop.permute.xlu0 %508
    %v511 = vadd.f32 %v501, %v509
    %v512 = vtanh.pop %v511
    %514 = vrot.lane.b32.xlu0 %v512, 32
    %v515 = vpop.permute.xlu0 %514
    %v517 = vmul.f32 %v499, %v515
    %519 = vrot.lane.b32.xlu0 %v517, 64
    %v520 = vpop.permute.xlu0 %519
    %522 = vst.msk [vmem:[#allocation2 + $0x4] sm:$0x3] %vm236, %v520
    %v523 = vrot.slane %v447, 4
    %524 = vrot.lane.b32.xlu0 %v523, 64
    %v525 = vpop.permute.xlu0 %524
    %v526 = vsel %vm101, %v525, 0
    %528 = vmatpush.msra.mxu0 0.0
    %529 = vmatpush.msra.mxu0 0.0
    %530 = vmatpush.msra.mxu0 0.0
    %531 = vmatpush.msra.mxu0 0.0
    %532 = vmatpush.msra.mxu0 0.0
    %533 = vmatpush.msra.mxu0 0.0
    %534 = vmatpush.msra.mxu0 0.0
    %535 = vmatpush.msra.mxu0 0.0
    %536 = vmatpush.msra.mxu0 0.0
    %537 = vmatpush.msra.mxu0 0.0
    %538 = vmatpush.msra.mxu0 0.0
    %539 = vmatpush.msra.mxu0 0.0
    %540 = vmatpush.msra.mxu0 %v91
    %541 = vmatpush.msra.mxu0 %v90
    %542 = vmatpush.msra.mxu0 %v89
    %543 = vmatpush.msra.mxu0 %v88
    %544 = vmatmul.f32.gmra.mxu0 %v526
    %v545 = vpop.f32.mrf.mxu0
    %v546 = vadd.f32 0.0, %v545
    %547 = vdwg.mxu0
    %v549 = vrot.slane %v546, 2
    %v551 = vadd.f32 %v83, %v549
    %v552 = vxor.u32 %v551, 2147483648
    %v553 = vmul.f32 %v552, 1.442695
    %v554 = vpow.pop %v553
    %v555 = vadd.f32 %v554, 1.0
    %v556 = vrcp.pop %v555
    %v557 = vmul.f32 %v555, %v556
    %v558 = vsub.f32 1.0, %v557
    %v559 = vmul.f32 %v556, %v558
    %v560 = vadd.f32 %v556, %v559
    %vm561 = vweird.f32 %v555
    %vm562 = vweird.f32 %v556
    %vm563 = vmor %vm561, %vm562
    %v564 = vsel %vm563, %v556, %v560
    %v565 = vand.u32 2147483647, %v555
    %vm566 = vcmp.eq.f32.partialorder %v565, 8.507059e+37
    %v567 = vand.u32 %v555, 2147483648
    %v568 = vor.u32 1.1754944e-38, %v567
    %v569 = vsel %vm566, %v568, %v564
    %v570 = vmul.f32 1.0, %v569
    %v571 = vtanh.pop %v551
    %v573 = vrot.slane %v441, 6
    %v575 = vmul.f32 %v570, %v573
    %577 = vrot.lane.b32.xlu0 %v571, 32
    %v578 = vpop.permute.xlu0 %577
    %v580 = vmul.f32 %v570, %v578
    %582 = vrot.lane.b32.xlu0 %v580, 32
    %v583 = vpop.permute.xlu0 %582
    %v585 = vadd.f32 %v575, %v583
    %v586 = vtanh.pop %v585
    %588 = vrot.lane.b32.xlu0 %v586, 32
    %v589 = vpop.permute.xlu0 %588
    %v591 = vmul.f32 %v570, %v589
    %593 = vrot.lane.b32.xlu0 %v591, 64
    %v594 = vpop.permute.xlu0 %593
    %v596 = vrot.slane %v517, 2
    %597 = vrot.lane.b32.xlu0 %v596, 96
    %v598 = vpop.permute.xlu0 %597
    %v600 = vsel %vm101, %v594, %v598
    %v602 = vrot.slane %v600, 6
    %v603 = vsel %vm171, %v602, 0
    %605 = vmatpush.msra.mxu0 0.0
    %606 = vmatpush.msra.mxu0 0.0
    %607 = vmatpush.msra.mxu0 0.0
    %608 = vmatpush.msra.mxu0 0.0
    %609 = vmatpush.msra.mxu0 0.0
    %610 = vmatpush.msra.mxu0 0.0
    %611 = vmatpush.msra.mxu0 0.0
    %612 = vmatpush.msra.mxu0 0.0
    %613 = vmatpush.msra.mxu0 %v99
    %614 = vmatpush.msra.mxu0 %v98
    %615 = vmatpush.msra.mxu0 %v97
    %616 = vmatpush.msra.mxu0 %v96
    %617 = vmatpush.msra.mxu0 %v95
    %618 = vmatpush.msra.mxu0 %v94
    %619 = vmatpush.msra.mxu0 %v93
    %620 = vmatpush.msra.mxu0 %v92
    %621 = vmatmul.f32.gmra.mxu0 %v603
    %v622 = vpop.f32.mrf.mxu0
    %v623 = vadd.f32 %v169, %v622
    %624 = vdwg.mxu0
    %v625 = vxor.u32 %v623, 2147483648
    %v626 = vmul.f32 %v625, 1.442695
    %v627 = vpow.pop %v626
    %v628 = vadd.f32 %v627, 1.0
    %v629 = vrcp.pop %v628
    %v630 = vmul.f32 %v628, %v629
    %v631 = vsub.f32 1.0, %v630
    %v632 = vmul.f32 %v629, %v631
    %v633 = vadd.f32 %v629, %v632
    %vm634 = vweird.f32 %v628
    %vm635 = vweird.f32 %v629
    %vm636 = vmor %vm634, %vm635
    %v637 = vsel %vm636, %v629, %v633
    %v638 = vand.u32 2147483647, %v628
    %vm639 = vcmp.eq.f32.partialorder %v638, 8.507059e+37
    %v640 = vand.u32 %v628, 2147483648
    %v641 = vor.u32 1.1754944e-38, %v640
    %v642 = vsel %vm639, %v641, %v637
    %v643 = vmul.f32 1.0, %v642
    %v644 = vtanh.pop %v623
    %v645 = vmul.f32 %v643, %v511
    %647 = vrot.lane.b32.xlu0 %v644, 32
    %v648 = vpop.permute.xlu0 %647
    %v650 = vmul.f32 %v643, %v648
    %652 = vrot.lane.b32.xlu0 %v650, 32
    %v653 = vpop.permute.xlu0 %652
    %v655 = vadd.f32 %v645, %v653
    %v656 = vtanh.pop %v655
    %658 = vrot.lane.b32.xlu0 %v656, 32
    %v659 = vpop.permute.xlu0 %658
    %v661 = vmul.f32 %v643, %v659
    %663 = vrot.lane.b32.xlu0 %v661, 64
    %v664 = vpop.permute.xlu0 %663
    %666 = vst.msk [vmem:[#allocation2 + $0x6] sm:$0x3] %vm236, %v664
    %v667 = vrot.slane %v591, 6
    %668 = vrot.lane.b32.xlu0 %v667, 64
    %v669 = vpop.permute.xlu0 %668
    %v670 = vsel %vm101, %v669, 0
    %672 = vmatpush.msra.mxu0 0.0
    %673 = vmatpush.msra.mxu0 0.0
    %674 = vmatpush.msra.mxu0 0.0
    %675 = vmatpush.msra.mxu0 0.0
    %676 = vmatpush.msra.mxu0 0.0
    %677 = vmatpush.msra.mxu0 0.0
    %678 = vmatpush.msra.mxu0 0.0
    %679 = vmatpush.msra.mxu0 0.0
    %680 = vmatpush.msra.mxu0 0.0
    %681 = vmatpush.msra.mxu0 0.0
    %682 = vmatpush.msra.mxu0 0.0
    %683 = vmatpush.msra.mxu0 0.0
    %684 = vmatpush.msra.mxu0 %v91
    %685 = vmatpush.msra.mxu0 %v90
    %686 = vmatpush.msra.mxu0 %v89
    %687 = vmatpush.msra.mxu0 %v88
    %688 = vmatmul.f32.gmra.mxu0 %v670
    %v689 = vpop.f32.mrf.mxu0
    %v690 = vadd.f32 0.0, %v689
    %691 = vdwg.mxu0
    %v692 = vadd.f32 %v86, %v690
    %v693 = vxor.u32 %v692, 2147483648
    %v694 = vmul.f32 %v693, 1.442695
    %v695 = vpow.pop %v694
    %v696 = vadd.f32 %v695, 1.0
    %v697 = vrcp.pop %v696
    %v698 = vmul.f32 %v696, %v697
    %v699 = vsub.f32 1.0, %v698
    %v700 = vmul.f32 %v697, %v699
    %v701 = vadd.f32 %v697, %v700
    %vm702 = vweird.f32 %v696
    %vm703 = vweird.f32 %v697
    %vm704 = vmor %vm702, %vm703
    %v705 = vsel %vm704, %v697, %v701
    %v706 = vand.u32 2147483647, %v696
    %vm707 = vcmp.eq.f32.partialorder %v706, 8.507059e+37
    %v708 = vand.u32 %v696, 2147483648
    %v709 = vor.u32 1.1754944e-38, %v708
    %v710 = vsel %vm707, %v709, %v705
    %v711 = vmul.f32 1.0, %v710
    %v712 = vtanh.pop %v692
    %v714 = vrot.slane %v585, 6
    %v716 = vmul.f32 %v711, %v714
    %718 = vrot.lane.b32.xlu0 %v712, 32
    %v719 = vpop.permute.xlu0 %718
    %v721 = vmul.f32 %v711, %v719
    %723 = vrot.lane.b32.xlu0 %v721, 32
    %v724 = vpop.permute.xlu0 %723
    %v726 = vadd.f32 %v716, %v724
    %v727 = vtanh.pop %v726
    %729 = vrot.lane.b32.xlu0 %v727, 32
    %v730 = vpop.permute.xlu0 %729
    %v732 = vmul.f32 %v711, %v730
    %734 = vrot.lane.b32.xlu0 %v732, 64
    %v735 = vpop.permute.xlu0 %734
    %737 = vrot.lane.b32.xlu0 %v661, 96
    %v738 = vpop.permute.xlu0 %737
    %v740 = vsel %vm101, %v735, %v738
    %v742 = vsel %vm171, %v740, 0
    %744 = vmatpush.msra.mxu0 0.0
    %745 = vmatpush.msra.mxu0 0.0
    %746 = vmatpush.msra.mxu0 0.0
    %747 = vmatpush.msra.mxu0 0.0
    %748 = vmatpush.msra.mxu0 0.0
    %749 = vmatpush.msra.mxu0 0.0
    %750 = vmatpush.msra.mxu0 0.0
    %751 = vmatpush.msra.mxu0 0.0
    %752 = vmatpush.msra.mxu0 %v99
    %753 = vmatpush.msra.mxu0 %v98
    %754 = vmatpush.msra.mxu0 %v97
    %755 = vmatpush.msra.mxu0 %v96
    %756 = vmatpush.msra.mxu0 %v95
    %757 = vmatpush.msra.mxu0 %v94
    %758 = vmatpush.msra.mxu0 %v93
    %759 = vmatpush.msra.mxu0 %v92
    %760 = vmatmul.f32.gmra.mxu0 %v742
    %v761 = vpop.f32.mrf.mxu0
    %v762 = vadd.f32 %v169, %v761
    %763 = vdwg.mxu0
    %v764 = vxor.u32 %v762, 2147483648
    %v765 = vmul.f32 %v764, 1.442695
    %v766 = vpow.pop %v765
    %v767 = vadd.f32 %v766, 1.0
    %v768 = vrcp.pop %v767
    %v769 = vmul.f32 %v767, %v768
    %v770 = vsub.f32 1.0, %v769
    %v771 = vmul.f32 %v768, %v770
    %v772 = vadd.f32 %v768, %v771
    %vm773 = vweird.f32 %v767
    %vm774 = vweird.f32 %v768
    %vm775 = vmor %vm773, %vm774
    %v776 = vsel %vm775, %v768, %v772
    %v777 = vand.u32 2147483647, %v767
    %vm778 = vcmp.eq.f32.partialorder %v777, 8.507059e+37
    %v779 = vand.u32 %v767, 2147483648
    %v780 = vor.u32 1.1754944e-38, %v779
    %v781 = vsel %vm778, %v780, %v776
    %v782 = vmul.f32 1.0, %v781
    %v783 = vtanh.pop %v762
    %v784 = vmul.f32 %v782, %v655
    %786 = vrot.lane.b32.xlu0 %v783, 32
    %v787 = vpop.permute.xlu0 %786
    %v789 = vmul.f32 %v782, %v787
    %791 = vrot.lane.b32.xlu0 %v789, 32
    %v792 = vpop.permute.xlu0 %791
    %v794 = vadd.f32 %v784, %v792
    %v795 = vtanh.pop %v794
    %797 = vrot.lane.b32.xlu0 %v795, 32
    %v798 = vpop.permute.xlu0 %797
    %v800 = vmul.f32 %v782, %v798
    %802 = vrot.lane.b32.xlu0 %v800, 64
    %v803 = vpop.permute.xlu0 %802
    %805 = vst.msk [vmem:[#allocation2 + $0x8] sm:$0x3] %vm236, %v803
    %v806 = vsel %vm101, %v735, 0
    %808 = vmatpush.msra.mxu0 0.0
    %809 = vmatpush.msra.mxu0 0.0
    %810 = vmatpush.msra.mxu0 0.0
    %811 = vmatpush.msra.mxu0 0.0
    %812 = vmatpush.msra.mxu0 0.0
    %813 = vmatpush.msra.mxu0 0.0
    %814 = vmatpush.msra.mxu0 0.0
    %815 = vmatpush.msra.mxu0 0.0
    %816 = vmatpush.msra.mxu0 0.0
    %817 = vmatpush.msra.mxu0 0.0
    %818 = vmatpush.msra.mxu0 0.0
    %819 = vmatpush.msra.mxu0 0.0
    %820 = vmatpush.msra.mxu0 %v91
    %821 = vmatpush.msra.mxu0 %v90
    %822 = vmatpush.msra.mxu0 %v89
    %823 = vmatpush.msra.mxu0 %v88
    %824 = vmatmul.f32.gmra.mxu0 %v806
    %v825 = vpop.f32.mrf.mxu0
    %v826 = vadd.f32 0.0, %v825
    %827 = vdwg.mxu0
    %v829 = vrot.slane %v826, 6
    %v831 = vadd.f32 %v86, %v829
    %v832 = vxor.u32 %v831, 2147483648
    %v833 = vmul.f32 %v832, 1.442695
    %v834 = vpow.pop %v833
    %v835 = vadd.f32 %v834, 1.0
    %v836 = vrcp.pop %v835
    %v837 = vmul.f32 %v835, %v836
    %v838 = vsub.f32 1.0, %v837
    %v839 = vmul.f32 %v836, %v838
    %v840 = vadd.f32 %v836, %v839
    %vm841 = vweird.f32 %v835
    %vm842 = vweird.f32 %v836
    %vm843 = vmor %vm841, %vm842
    %v844 = vsel %vm843, %v836, %v840
    %v845 = vand.u32 2147483647, %v835
    %vm846 = vcmp.eq.f32.partialorder %v845, 8.507059e+37
    %v847 = vand.u32 %v835, 2147483648
    %v848 = vor.u32 1.1754944e-38, %v847
    %v849 = vsel %vm846, %v848, %v844
    %v850 = vmul.f32 1.0, %v849
    %v851 = vtanh.pop %v831
    %v853 = vrot.slane %v726, 6
    %v855 = vmul.f32 %v850, %v853
    %857 = vrot.lane.b32.xlu0 %v851, 32
    %v858 = vpop.permute.xlu0 %857
    %v860 = vmul.f32 %v850, %v858
    %862 = vrot.lane.b32.xlu0 %v860, 32
    %v863 = vpop.permute.xlu0 %862
    %v865 = vadd.f32 %v855, %v863
    %v866 = vtanh.pop %v865
    %868 = vrot.lane.b32.xlu0 %v866, 32
    %v869 = vpop.permute.xlu0 %868
    %v871 = vmul.f32 %v850, %v869
    %873 = vrot.lane.b32.xlu0 %v871, 64
    %v874 = vpop.permute.xlu0 %873
    %v876 = vrot.slane %v800, 6
    %877 = vrot.lane.b32.xlu0 %v876, 96
    %v878 = vpop.permute.xlu0 %877
    %v880 = vsel %vm101, %v874, %v878
    %v882 = vrot.slane %v880, 2
    %v883 = vsel %vm171, %v882, 0
    %885 = vmatpush.msra.mxu0 0.0
    %886 = vmatpush.msra.mxu0 0.0
    %887 = vmatpush.msra.mxu0 0.0
    %888 = vmatpush.msra.mxu0 0.0
    %889 = vmatpush.msra.mxu0 0.0
    %890 = vmatpush.msra.mxu0 0.0
    %891 = vmatpush.msra.mxu0 0.0
    %892 = vmatpush.msra.mxu0 0.0
    %893 = vmatpush.msra.mxu0 %v99
    %894 = vmatpush.msra.mxu0 %v98
    %895 = vmatpush.msra.mxu0 %v97
    %896 = vmatpush.msra.mxu0 %v96
    %897 = vmatpush.msra.mxu0 %v95
    %898 = vmatpush.msra.mxu0 %v94
    %899 = vmatpush.msra.mxu0 %v93
    %900 = vmatpush.msra.mxu0 %v92
    %901 = vmatmul.f32.gmra.mxu0 %v883
    %v902 = vpop.f32.mrf.mxu0
    %v903 = vadd.f32 %v169, %v902
    %904 = vdwg.mxu0
    %v905 = vxor.u32 %v903, 2147483648
    %v906 = vmul.f32 %v905, 1.442695
    %v907 = vpow.pop %v906
    %v908 = vadd.f32 %v907, 1.0
    %v909 = vrcp.pop %v908
    %v910 = vmul.f32 %v908, %v909
    %v911 = vsub.f32 1.0, %v910
    %v912 = vmul.f32 %v909, %v911
    %v913 = vadd.f32 %v909, %v912
    %vm914 = vweird.f32 %v908
    %vm915 = vweird.f32 %v909
    %vm916 = vmor %vm914, %vm915
    %v917 = vsel %vm916, %v909, %v913
    %v918 = vand.u32 2147483647, %v908
    %vm919 = vcmp.eq.f32.partialorder %v918, 8.507059e+37
    %v920 = vand.u32 %v908, 2147483648
    %v921 = vor.u32 1.1754944e-38, %v920
    %v922 = vsel %vm919, %v921, %v917
    %v923 = vmul.f32 1.0, %v922
    %v924 = vtanh.pop %v903
    %v925 = vmul.f32 %v923, %v794
    %927 = vrot.lane.b32.xlu0 %v924, 32
    %v928 = vpop.permute.xlu0 %927
    %v930 = vmul.f32 %v923, %v928
    %932 = vrot.lane.b32.xlu0 %v930, 32
    %v933 = vpop.permute.xlu0 %932
    %v935 = vadd.f32 %v925, %v933
    %v936 = vtanh.pop %v935
    %938 = vrot.lane.b32.xlu0 %v936, 32
    %v939 = vpop.permute.xlu0 %938
    %v941 = vmul.f32 %v923, %v939
    %943 = vrot.lane.b32.xlu0 %v941, 64
    %v944 = vpop.permute.xlu0 %943
    %946 = vst.msk [vmem:[#allocation2 + $0xa] sm:$0x3] %vm236, %v944
    %v947 = vrot.slane %v871, 2
    %948 = vrot.lane.b32.xlu0 %v947, 64
    %v949 = vpop.permute.xlu0 %948
    %v950 = vsel %vm101, %v949, 0
    %952 = vmatpush.msra.mxu0 0.0
    %953 = vmatpush.msra.mxu0 0.0
    %954 = vmatpush.msra.mxu0 0.0
    %955 = vmatpush.msra.mxu0 0.0
    %956 = vmatpush.msra.mxu0 0.0
    %957 = vmatpush.msra.mxu0 0.0
    %958 = vmatpush.msra.mxu0 0.0
    %959 = vmatpush.msra.mxu0 0.0
    %960 = vmatpush.msra.mxu0 0.0
    %961 = vmatpush.msra.mxu0 0.0
    %962 = vmatpush.msra.mxu0 0.0
    %963 = vmatpush.msra.mxu0 0.0
    %964 = vmatpush.msra.mxu0 %v91
    %965 = vmatpush.msra.mxu0 %v90
    %966 = vmatpush.msra.mxu0 %v89
    %967 = vmatpush.msra.mxu0 %v88
    %968 = vmatmul.f32.gmra.mxu0 %v950
    %v969 = vpop.f32.mrf.mxu0
    %v970 = vadd.f32 0.0, %v969
    %971 = vdwg.mxu0
    %v973 = vrot.slane %v970, 4
    %v975 = vadd.f32 %v86, %v973
    %v976 = vxor.u32 %v975, 2147483648
    %v977 = vmul.f32 %v976, 1.442695
    %v978 = vpow.pop %v977
    %v979 = vadd.f32 %v978, 1.0
    %v980 = vrcp.pop %v979
    %v981 = vmul.f32 %v979, %v980
    %v982 = vsub.f32 1.0, %v981
    %v983 = vmul.f32 %v980, %v982
    %v984 = vadd.f32 %v980, %v983
    %vm985 = vweird.f32 %v979
    %vm986 = vweird.f32 %v980
    %vm987 = vmor %vm985, %vm986
    %v988 = vsel %vm987, %v980, %v984
    %v989 = vand.u32 2147483647, %v979
    %vm990 = vcmp.eq.f32.partialorder %v989, 8.507059e+37
    %v991 = vand.u32 %v979, 2147483648
    %v992 = vor.u32 1.1754944e-38, %v991
    %v993 = vsel %vm990, %v992, %v988
    %v994 = vmul.f32 1.0, %v993
    %v995 = vtanh.pop %v975
    %v997 = vrot.slane %v865, 6
    %v999 = vmul.f32 %v994, %v997
    %1001 = vrot.lane.b32.xlu0 %v995, 32
    %v1002 = vpop.permute.xlu0 %1001
    %v1004 = vmul.f32 %v994, %v1002
    %1006 = vrot.lane.b32.xlu0 %v1004, 32
    %v1007 = vpop.permute.xlu0 %1006
    %v1009 = vadd.f32 %v999, %v1007
    %v1010 = vtanh.pop %v1009
    %1012 = vrot.lane.b32.xlu0 %v1010, 32
    %v1013 = vpop.permute.xlu0 %1012
    %v1015 = vmul.f32 %v994, %v1013
    %1017 = vrot.lane.b32.xlu0 %v1015, 64
    %v1018 = vpop.permute.xlu0 %1017
    %v1020 = vrot.slane %v941, 4
    %1021 = vrot.lane.b32.xlu0 %v1020, 96
    %v1022 = vpop.permute.xlu0 %1021
    %v1024 = vsel %vm101, %v1018, %v1022
    %v1026 = vrot.slane %v1024, 4
    %v1027 = vsel %vm171, %v1026, 0
    %1029 = vmatpush.msra.mxu0 0.0
    %1030 = vmatpush.msra.mxu0 0.0
    %1031 = vmatpush.msra.mxu0 0.0
    %1032 = vmatpush.msra.mxu0 0.0
    %1033 = vmatpush.msra.mxu0 0.0
    %1034 = vmatpush.msra.mxu0 0.0
    %1035 = vmatpush.msra.mxu0 0.0
    %1036 = vmatpush.msra.mxu0 0.0
    %1037 = vmatpush.msra.mxu0 %v99
    %1038 = vmatpush.msra.mxu0 %v98
    %1039 = vmatpush.msra.mxu0 %v97
    %1040 = vmatpush.msra.mxu0 %v96
    %1041 = vmatpush.msra.mxu0 %v95
    %1042 = vmatpush.msra.mxu0 %v94
    %1043 = vmatpush.msra.mxu0 %v93
    %1044 = vmatpush.msra.mxu0 %v92
    %1045 = vmatmul.f32.gmra.mxu0 %v1027
    %v1046 = vpop.f32.mrf.mxu0
    %v1047 = vadd.f32 %v169, %v1046
    %1048 = vdwg.mxu0
    %v1049 = vxor.u32 %v1047, 2147483648
    %v1050 = vmul.f32 %v1049, 1.442695
    %v1051 = vpow.pop %v1050
    %v1052 = vadd.f32 %v1051, 1.0
    %v1053 = vrcp.pop %v1052
    %v1054 = vmul.f32 %v1052, %v1053
    %v1055 = vsub.f32 1.0, %v1054
    %v1056 = vmul.f32 %v1053, %v1055
    %v1057 = vadd.f32 %v1053, %v1056
    %vm1058 = vweird.f32 %v1052
    %vm1059 = vweird.f32 %v1053
    %vm1060 = vmor %vm1058, %vm1059
    %v1061 = vsel %vm1060, %v1053, %v1057
    %v1062 = vand.u32 2147483647, %v1052
    %vm1063 = vcmp.eq.f32.partialorder %v1062, 8.507059e+37
    %v1064 = vand.u32 %v1052, 2147483648
    %v1065 = vor.u32 1.1754944e-38, %v1064
    %v1066 = vsel %vm1063, %v1065, %v1061
    %v1067 = vmul.f32 1.0, %v1066
    %v1068 = vtanh.pop %v1047
    %v1069 = vmul.f32 %v1067, %v935
    %1071 = vrot.lane.b32.xlu0 %v1068, 32
    %v1072 = vpop.permute.xlu0 %1071
    %v1074 = vmul.f32 %v1067, %v1072
    %1076 = vrot.lane.b32.xlu0 %v1074, 32
    %v1077 = vpop.permute.xlu0 %1076
    %v1079 = vadd.f32 %v1069, %v1077
    %v1080 = vtanh.pop %v1079
    %1082 = vrot.lane.b32.xlu0 %v1080, 32
    %v1083 = vpop.permute.xlu0 %1082
    %v1085 = vmul.f32 %v1067, %v1083
    %1087 = vrot.lane.b32.xlu0 %v1085, 64
    %v1088 = vpop.permute.xlu0 %1087
    %1090 = vst.msk [vmem:[#allocation2 + $0xc] sm:$0x3] %vm236, %v1088
    %v1091 = vrot.slane %v1015, 4
    %1092 = vrot.lane.b32.xlu0 %v1091, 64
    %v1093 = vpop.permute.xlu0 %1092
    %v1094 = vsel %vm101, %v1093, 0
    %1096 = vmatpush.msra.mxu0 0.0
    %1097 = vmatpush.msra.mxu0 0.0
    %1098 = vmatpush.msra.mxu0 0.0
    %1099 = vmatpush.msra.mxu0 0.0
    %1100 = vmatpush.msra.mxu0 0.0
    %1101 = vmatpush.msra.mxu0 0.0
    %1102 = vmatpush.msra.mxu0 0.0
    %1103 = vmatpush.msra.mxu0 0.0
    %1104 = vmatpush.msra.mxu0 0.0
    %1105 = vmatpush.msra.mxu0 0.0
    %1106 = vmatpush.msra.mxu0 0.0
    %1107 = vmatpush.msra.mxu0 0.0
    %1108 = vmatpush.msra.mxu0 %v91
    %1109 = vmatpush.msra.mxu0 %v90
    %1110 = vmatpush.msra.mxu0 %v89
    %1111 = vmatpush.msra.mxu0 %v88
    %1112 = vmatmul.f32.gmra.mxu0 %v1094
    %v1113 = vpop.f32.mrf.mxu0
    %v1114 = vadd.f32 0.0, %v1113
    %1115 = vdwg.mxu0
    %v1117 = vrot.slane %v1114, 2
    %v1119 = vadd.f32 %v86, %v1117
    %v1120 = vxor.u32 %v1119, 2147483648
    %v1121 = vmul.f32 %v1120, 1.442695
    %v1122 = vpow.pop %v1121
    %v1123 = vadd.f32 %v1122, 1.0
    %v1124 = vrcp.pop %v1123
    %v1125 = vmul.f32 %v1123, %v1124
    %v1126 = vsub.f32 1.0, %v1125
    %v1127 = vmul.f32 %v1124, %v1126
    %v1128 = vadd.f32 %v1124, %v1127
    %vm1129 = vweird.f32 %v1123
    %vm1130 = vweird.f32 %v1124
    %vm1131 = vmor %vm1129, %vm1130
    %v1132 = vsel %vm1131, %v1124, %v1128
    %v1133 = vand.u32 2147483647, %v1123
    %vm1134 = vcmp.eq.f32.partialorder %v1133, 8.507059e+37
    %v1135 = vand.u32 %v1123, 2147483648
    %v1136 = vor.u32 1.1754944e-38, %v1135
    %v1137 = vsel %vm1134, %v1136, %v1132
    %v1138 = vmul.f32 1.0, %v1137
    %v1139 = vtanh.pop %v1119
    %v1141 = vrot.slane %v1009, 6
    %v1143 = vmul.f32 %v1138, %v1141
    %1145 = vrot.lane.b32.xlu0 %v1139, 32
    %v1146 = vpop.permute.xlu0 %1145
    %v1148 = vmul.f32 %v1138, %v1146
    %1150 = vrot.lane.b32.xlu0 %v1148, 32
    %v1151 = vpop.permute.xlu0 %1150
    %v1153 = vadd.f32 %v1143, %v1151
    %v1154 = vtanh.pop %v1153
    %1156 = vrot.lane.b32.xlu0 %v1154, 32
    %v1157 = vpop.permute.xlu0 %1156
    %v1159 = vmul.f32 %v1138, %v1157
    %1161 = vrot.lane.b32.xlu0 %v1159, 64
    %v1162 = vpop.permute.xlu0 %1161
    %v1164 = vrot.slane %v1085, 2
    %1165 = vrot.lane.b32.xlu0 %v1164, 96
    %v1166 = vpop.permute.xlu0 %1165
    %v1168 = vsel %vm101, %v1162, %v1166
    %v1170 = vrot.slane %v1168, 6
    %v1171 = vsel %vm171, %v1170, 0
    %1173 = vmatpush.msra.mxu0 0.0
    %1174 = vmatpush.msra.mxu0 0.0
    %1175 = vmatpush.msra.mxu0 0.0
    %1176 = vmatpush.msra.mxu0 0.0
    %1177 = vmatpush.msra.mxu0 0.0
    %1178 = vmatpush.msra.mxu0 0.0
    %1179 = vmatpush.msra.mxu0 0.0
    %1180 = vmatpush.msra.mxu0 0.0
    %1181 = vmatpush.msra.mxu0 %v99
    %1182 = vmatpush.msra.mxu0 %v98
    %1183 = vmatpush.msra.mxu0 %v97
    %1184 = vmatpush.msra.mxu0 %v96
    %1185 = vmatpush.msra.mxu0 %v95
    %1186 = vmatpush.msra.mxu0 %v94
    %1187 = vmatpush.msra.mxu0 %v93
    %1188 = vmatpush.msra.mxu0 %v92
    %1189 = vmatmul.f32.gmra.mxu0 %v1171
    %v1190 = vpop.f32.mrf.mxu0
    %v1191 = vadd.f32 %v169, %v1190
    %1192 = vdwg.mxu0
    %v1193 = vxor.u32 %v1191, 2147483648
    %v1194 = vmul.f32 %v1193, 1.442695
    %v1195 = vpow.pop %v1194
    %v1196 = vadd.f32 %v1195, 1.0
    %v1197 = vrcp.pop %v1196
    %v1198 = vmul.f32 %v1196, %v1197
    %v1199 = vsub.f32 1.0, %v1198
    %v1200 = vmul.f32 %v1197, %v1199
    %v1201 = vadd.f32 %v1197, %v1200
    %vm1202 = vweird.f32 %v1196
    %vm1203 = vweird.f32 %v1197
    %vm1204 = vmor %vm1202, %vm1203
    %v1205 = vsel %vm1204, %v1197, %v1201
    %v1206 = vand.u32 2147483647, %v1196
    %vm1207 = vcmp.eq.f32.partialorder %v1206, 8.507059e+37
    %v1208 = vand.u32 %v1196, 2147483648
    %v1209 = vor.u32 1.1754944e-38, %v1208
    %v1210 = vsel %vm1207, %v1209, %v1205
    %v1211 = vmul.f32 1.0, %v1210
    %v1212 = vtanh.pop %v1191
    %v1213 = vmul.f32 %v1211, %v1079
    %1215 = vrot.lane.b32.xlu0 %v1212, 32
    %v1216 = vpop.permute.xlu0 %1215
    %v1218 = vmul.f32 %v1211, %v1216
    %1220 = vrot.lane.b32.xlu0 %v1218, 32
    %v1221 = vpop.permute.xlu0 %1220
    %v1223 = vadd.f32 %v1213, %v1221
    %v1224 = vtanh.pop %v1223
    %1226 = vrot.lane.b32.xlu0 %v1224, 32
    %v1227 = vpop.permute.xlu0 %1226
    %v1229 = vmul.f32 %v1211, %v1227
    %1231 = vrot.lane.b32.xlu0 %v1229, 64
    %v1232 = vpop.permute.xlu0 %1231
    %1234 = vst.msk [vmem:[#allocation2 + $0xe] sm:$0x3] %vm236, %v1232
    %v1235 = vld [vmem:[#allocation2] sm:$0xff]
    %v1236 = vld [vmem:[#allocation2 + $0x8] sm:$0xff]
    %v1237 = vld [vmem:[%s6] sm:$0xff]
    %v1238 = vld [vmem:[%s6 + $0x8] sm:$0xff]
    %v1239 = vld [vmem:[%s6 + $0x10] sm:$0xff]
    %v1240 = vld [vmem:[%s6 + $0x18] sm:$0xff]
    %v1241 = vld [vmem:[#allocation3] sm:$0x1]
    %v1243 = vperm.slane %v1241, 0
    %v1246 = vsel %vm101, %v1235, 0
    %v1249 = vsel %vm101, %v1236, 0
    %1251 = vmatpush.msra.mxu0 0.0
    %1252 = vmatpush.msra.mxu0 0.0
    %1253 = vmatpush.msra.mxu0 0.0
    %1254 = vmatpush.msra.mxu0 0.0
    %1255 = vmatpush.msra.mxu0 0.0
    %1256 = vmatpush.msra.mxu0 0.0
    %1257 = vmatpush.msra.mxu0 0.0
    %1258 = vmatpush.msra.mxu0 0.0
    %1259 = vmatpush.msra.mxu0 0.0
    %1260 = vmatpush.msra.mxu0 0.0
    %1261 = vmatpush.msra.mxu0 0.0
    %1262 = vmatpush.msra.mxu0 0.0
    %1263 = vmatpush.msra.mxu0 %v1240
    %1264 = vmatpush.msra.mxu0 %v1239
    %1265 = vmatpush.msra.mxu0 %v1238
    %1266 = vmatpush.msra.mxu0 %v1237
    %1267 = vmatmul.f32.gmra.mxu0 %v1246
    %v1268 = vpop.f32.mrf.mxu0
    %v1269 = vadd.f32 %v1243, %v1268
    %1270 = vmatmul.f32.gmra.mxu0 %v1249
    %v1271 = vpop.f32.mrf.mxu0
    %v1272 = vadd.f32 %v1243, %v1271
    %1273 = vdwg.mxu0
    %vm1274 = vcmask 7168
    %1275 = vst.msk [vmem:[%s8] sm:$0xff] %vm1274, %v1269
    %1276 = vst.msk [vmem:[%s8 + $0x8] sm:$0xff] %vm1274, %v1272
    // Predicated region
    $region38: #{pred_lstm_forward.1} parent=1 // pred_check
      _
    $region39: #{pred_lstm_forward.1} parent=1 // pred_check_branch
      %1278 = sbr.rel (0) target = $region41
    $region40: #{pred_lstm_forward.1} parent=1 // pred_region
      _
    $region41: #{pred_lstm_forward.1} parent=1 // pred_fallthru
      _
    // Predicated region
    $region42: #{pred_lstm_forward.1} parent=1 // pred_check
      _
    $region43: #{pred_lstm_forward.1} parent=1 // pred_check_branch
      %1280 = sbr.rel (0) target = $region45
    $region44: #{pred_lstm_forward.1} parent=1 // pred_region
      _
    $region45: #{pred_lstm_forward.1} parent=1 // pred_fallthru
      _
    %1281 = vsyncpa [#allocation5], 1

</llo_original>
